<compile_context>
chip_gen: v7x
topology: tpu7x:2x2x1
jax: 0.10.0
libtpu: 0.0.40
codegen_flags: <defaults>
</compile_context>

<pallas_src>
import functools

import jax
import jax.numpy as jnp
from jax import lax
from jax.experimental import pallas as pl
from jax.experimental.pallas import tpu as pltpu


def cross_attn_kernel(x1_ref, x2_ref, wq_ref, wkv_ref, wo_ref, bo_ref,
                      out_ref, kv_sc, o_sc, *, heads, dim_head):
    """One (batch, query-tile) grid step.

    x1_ref : (TQ, dim)       queries, compute dtype
    x2_ref : (L2, dim)       keys/values source, compute dtype
    wq_ref : (dim, inner)    pre-scaled by dim_head**-0.5, compute dtype
    wkv_ref: (dim, 2*inner)  compute dtype
    wo_ref : (inner, dim)    compute dtype
    bo_ref : (1, dim)        f32
    kv_sc  : (L2, 2*inner)   persistent K|V scratch (filled once per batch)
    o_sc   : (TQ, inner)     per-head outputs concatenated along lanes
    """
    j = pl.program_id(1)
    inner = heads * dim_head
    cdtype = kv_sc.dtype

    # ---- K/V projection of x2: one wide lane-dense matmul, only on the first
    # ---- query tile of this batch element; resident in VMEM for all q-tiles.
    @pl.when(j == 0)
    def _():
        kv_sc[...] = jnp.dot(x2_ref[...], wkv_ref[...],
                             preferred_element_type=jnp.float32).astype(cdtype)

    # ---- Q projection for all heads in one matmul (scale already in wq).
    q = jnp.dot(x1_ref[...], wq_ref[...],
                preferred_element_type=jnp.float32).astype(cdtype)      # (TQ, inner)

    # ---- per-head attention; outputs land in the lane-concat scratch.
    for h in range(heads):
        lo = h * dim_head
        hi = lo + dim_head
        q_h = q[:, lo:hi]                                               # (TQ, dh)
        k_h = kv_sc[:, lo:hi]                                           # (L2, dh)
        v_h = kv_sc[:, inner + lo:inner + hi]                           # (L2, dh)

        # scores: contract head dims (== q_h @ k_h.T without an XLU transpose)
        s = lax.dot_general(q_h, k_h, (((1,), (1,)), ((), ())),
                            preferred_element_type=jnp.float32)         # (TQ, L2) f32

        m = jnp.max(s, axis=-1, keepdims=True)
        e = jnp.exp(s - m)
        denom = jnp.sum(e, axis=-1, keepdims=True)                      # (TQ, 1)
        r = pl.reciprocal(denom, approx=True)                           # EUP slot
        r = r * (2.0 - denom * r)       # one Newton step on (TQ,1): ~free, f32 acc.
        p = (e * r).astype(cdtype)

        o_sc[:, lo:hi] = jnp.dot(p, v_h,
                                 preferred_element_type=jnp.float32).astype(cdtype)

    # ---- output projection: one wide matmul over the concatenated heads.
    out = jnp.dot(o_sc[...], wo_ref[...], preferred_element_type=jnp.float32)
    out_ref[...] = (out + bo_ref[...]).astype(out_ref.dtype)


def cross_attention_1(x1, x2, params, *, heads, dim_head, q_tile=None):
    """x1: (B, L1, dim) queries, x2: (B, L2, dim) keys/values."""
    B, L1, dim = x1.shape
    B2, L2, dim2 = x2.shape
    assert dim2 == dim and B2 == B, "x1/x2 shapes must match in batch and feature dim"
    inner = heads * dim_head
    scale = dim_head ** -0.5

    cdtype = x1.dtype
    itemsize = jnp.dtype(cdtype).itemsize

    # Weights in the compute dtype (no in-kernel upcast); softmax scale folded
    # into wq; bias kept in f32 for the final accumulation add.
    wq = (params["wq"].astype(jnp.float32) * scale).astype(cdtype)       # (dim, inner)
    wkv = params["wkv"].astype(cdtype)                                   # (dim, 2*inner)
    wo = params["wo"].astype(cdtype)                                     # (inner, dim)
    bo = params["bo"].astype(jnp.float32).reshape(1, dim)                # (1, dim) f32
    x2 = x2.astype(cdtype)

    # ---- VMEM budget (per generation) and query-tile size -------------------
    vmem_cap = 128 << 20
    try:
        vmem_cap = int(pltpu.get_tpu_info().vmem_capacity_bytes)
    except Exception:
        pass
    # ~50 MiB headroom target on v7x (64 MiB physical), ~100 MiB on v5e/v6e (128 MiB).
    vmem_budget = min(int(vmem_cap * 0.78), 100 << 20)

    if q_tile is None:
        q_tile = 512 if vmem_budget >= (96 << 20) else 256
    if L1 <= q_tile:
        q_tile = L1

    n_q = -(-L1 // q_tile)
    L1p = n_q * q_tile
    if L1p != L1:
        x1 = jnp.pad(x1, ((0, 0), (0, L1p - L1), (0, 0)))

    # Resident-set estimate -> explicit vmem limit (double-buffered x1/out tiles,
    # single-buffered x2/weights, K|V + head-concat scratch, f32 score temps).
    w_bytes = (wq.size + wkv.size + wo.size) * itemsize + bo.size * 4
    resident = (
        2 * q_tile * dim * itemsize            # x1 tile (double buffer)
        + 2 * q_tile * dim * itemsize          # out tile (double buffer)
        + L2 * dim * itemsize                  # x2 (single buffer)
        + w_bytes                              # weights + bias (single buffer)
        + L2 * 2 * inner * itemsize            # K|V scratch
        + q_tile * inner * itemsize            # head-concat output scratch
        + 4 * q_tile * L2 * 4                  # f32 softmax temporaries
    )
    vmem_limit = int(min(max(2 * resident, 32 << 20), vmem_budget))

    flops_per_b = 2 * (L1p * dim * inner            # q projection
                       + L2 * dim * 2 * inner       # kv projection
                       + 2 * L1p * L2 * inner       # scores + PV
                       + L1p * inner * dim)         # output projection
    bytes_accessed = ((x1.size + x2.size) * itemsize
                      + w_bytes
                      + B * L1p * dim * itemsize)

    kernel = functools.partial(cross_attn_kernel, heads=heads, dim_head=dim_head)
    has_buffered = hasattr(pl, "Buffered")

    def run(single_buffer):
        def inv_spec(shape, idx):
            # Grid-invariant operands: single-buffer to reclaim pipeline VMEM.
            if single_buffer:
                return pl.BlockSpec(shape, idx, pipeline_mode=pl.Buffered(1))
            return pl.BlockSpec(shape, idx)

        return pl.pallas_call(
            kernel,
            out_shape=jax.ShapeDtypeStruct((B, L1p, dim), cdtype),
            grid=(B, n_q),
            in_specs=[
                pl.BlockSpec((None, q_tile, dim), lambda b, j: (b, j, 0)),   # x1 tile
                inv_spec((None, L2, dim), lambda b, j: (b, 0, 0)),           # x2 (full per batch)
                inv_spec(wq.shape, lambda b, j: (0, 0)),
                inv_spec(wkv.shape, lambda b, j: (0, 0)),
                inv_spec(wo.shape, lambda b, j: (0, 0)),
                inv_spec(bo.shape, lambda b, j: (0, 0)),
            ],
            out_specs=pl.BlockSpec((None, q_tile, dim), lambda b, j: (b, j, 0)),
            scratch_shapes=[
                pltpu.VMEM((L2, 2 * inner), cdtype),     # K|V, lane-concatenated
                pltpu.VMEM((q_tile, inner), cdtype),     # per-head outputs (concat)
            ],
            compiler_params=pltpu.CompilerParams(
                dimension_semantics=("parallel", "arbitrary"),
                vmem_limit_bytes=vmem_limit),
            cost_estimate=pl.CostEstimate(
                flops=int(B * flops_per_b),
                transcendentals=int(B * heads * L1p * L2),
                bytes_accessed=int(bytes_accessed)),
        )(x1, x2, wq, wkv, wo, bo)

    if has_buffered:
        try:
            out = run(single_buffer=True)
        except Exception:
            # Older JAX without pipeline_mode / Buffered: fall back to defaults.
            out = run(single_buffer=False)
    else:
        out = run(single_buffer=False)

    return out[:, :L1, :]


# ------------------------- pure-JAX reference ------------------------------
def reference(x1, x2, params, *, heads, dim_head):
    inner = heads * dim_head
    q = x1 @ params["wq"]
    kv = x2 @ params["wkv"]
    k, v = kv[..., :inner], kv[..., inner:]

    def split(t):
        b, l, n = t.shape
        return t.reshape(b, l, heads, dim_head).transpose(0, 2, 1, 3)

    q, k, v = map(split, (q, k, v))
    attn = jnp.einsum("bhid,bhjd->bhij", q, k) * (dim_head ** -0.5)
    attn = jax.nn.softmax(attn, axis=-1)
    o = jnp.einsum("bhij,bhjd->bhid", attn, v)
    o = o.transpose(0, 2, 1, 3).reshape(x1.shape[0], x1.shape[1], inner)
    return o @ params["wo"] + params["bo"]


if __name__ == "__main__":
    key = jax.random.PRNGKey(0)
    k1, k2, kq, kkv, ko, kb = jax.random.split(key, 6)

    B, L1, L2 = 2, 20, 16          # L1 deliberately not a multiple of q_tile
    dim, heads, dim_head = 32, 2, 16
    inner = heads * dim_head

    x1 = jax.random.normal(k1, (B, L1, dim), jnp.float32)
    x2 = jax.random.normal(k2, (B, L2, dim), jnp.float32)

    def torch_linear(k, fan_in, shape):
        bound = 1.0 / (fan_in ** 0.5)
        return jax.random.uniform(k, shape, jnp.float32, -bound, bound)

    params = {
        # stored pre-transposed as (in_features, out_features)
        "wq": torch_linear(kq, dim, (dim, inner)),
        "wkv": torch_linear(kkv, dim, (dim, 2 * inner)),
        "wo": torch_linear(ko, inner, (inner, dim)),
        "bo": torch_linear(kb, inner, (dim,)),
    }

    ref = reference(x1, x2, params, heads=heads, dim_head=dim_head)

    # f32 path, multiple query tiles (q_tile=8 -> padding + scratch reuse path).
    out = cross_attention_1(x1, x2, params, heads=heads, dim_head=dim_head, q_tile=8)
    out = jax.block_until_ready(out)
    assert out.shape == (B, L1, dim), out.shape
    assert jnp.allclose(out, ref, rtol=1e-4, atol=1e-4), "f32 mismatch vs JAX reference"

    # bf16 path (exercises bf16 MXU operands, bf16 K/V scratch).
    out_bf = cross_attention_1(x1.astype(jnp.bfloat16), x2.astype(jnp.bfloat16),
                               params, heads=heads, dim_head=dim_head)
    out_bf = jax.block_until_ready(out_bf)
    assert out_bf.shape == (B, L1, dim), out_bf.shape
    assert jnp.allclose(out_bf.astype(jnp.float32), ref, rtol=5e-2, atol=5e-2), \
        "bf16 mismatch vs JAX reference"

    print("KERNEL_OK")
</pallas_src>

<mosaic_0001>
module attributes {stable_mosaic.version = 11 : i64} {
  func.func @cross_attn_kernel(%arg0: i32, %arg1: i32, %arg2: memref<1x8x32xf32, #tpu.memory_space<vmem>>, %arg3: memref<1x16x32xf32, #tpu.memory_space<vmem>>, %arg4: memref<32x32xf32, #tpu.memory_space<vmem>>, %arg5: memref<32x64xf32, #tpu.memory_space<vmem>>, %arg6: memref<32x32xf32, #tpu.memory_space<vmem>>, %arg7: memref<1x32xf32, #tpu.memory_space<vmem>>, %arg8: memref<1x8x32xf32, #tpu.memory_space<vmem>>, %arg9: memref<16x64xf32, #tpu.memory_space<vmem>>, %arg10: memref<8x32xf32, #tpu.memory_space<vmem>>) attributes {dimension_semantics = [#tpu.dimension_semantics<parallel>, #tpu.dimension_semantics<arbitrary>], iteration_bounds = array<i64: 2, 3>, scalar_prefetch = 0 : i64, scratch_operands = 2 : i64, tpu.core_type = #tpu.core_type<tc>, window_params = [{transform_indices = @transform_0, window_bounds = array<i64: 1, 8, 32>}, {pipeline_mode = #tpu.pipeline_mode<synchronous>, transform_indices = @transform_1, window_bounds = array<i64: 1, 16, 32>}, {pipeline_mode = #tpu.pipeline_mode<synchronous>, transform_indices = @transform_2, window_bounds = array<i64: 32, 32>}, {pipeline_mode = #tpu.pipeline_mode<synchronous>, transform_indices = @transform_3, window_bounds = array<i64: 32, 64>}, {pipeline_mode = #tpu.pipeline_mode<synchronous>, transform_indices = @transform_4, window_bounds = array<i64: 32, 32>}, {pipeline_mode = #tpu.pipeline_mode<synchronous>, transform_indices = @transform_5, window_bounds = array<i64: 1, 32>}, {transform_indices = @transform_6, window_bounds = array<i64: 1, 8, 32>}]} {
    %c0_i32 = arith.constant 0 : i32
    %0 = arith.cmpi eq, %arg1, %c0_i32 : i32
    %1 = arith.extui %0 : i1 to i32
    %c0_i32_0 = arith.constant 0 : i32
    %2 = arith.cmpi ne, %1, %c0_i32_0 : i32
    scf.if %2 {
      %c0_34 = arith.constant 0 : index
      %c0_35 = arith.constant 0 : index
      %c0_36 = arith.constant 0 : index
      %56 = vector.load %arg3[%c0_34, %c0_35, %c0_36] : memref<1x16x32xf32, #tpu.memory_space<vmem>>, vector<1x16x32xf32>
      %57 = vector.shape_cast %56 : vector<1x16x32xf32> to vector<16x32xf32>
      %c0_37 = arith.constant 0 : index
      %c0_38 = arith.constant 0 : index
      %58 = vector.load %arg5[%c0_37, %c0_38] : memref<32x64xf32, #tpu.memory_space<vmem>>, vector<32x64xf32>
      %cst_39 = arith.constant dense<0.000000e+00> : vector<16x64xf32>
      %59 = tpu.matmul %57, %58, %cst_39 {dimension_numbers = #tpu.dot_dimension_numbers<[1], [0], [0], [1], [0, 0, 1, 1], [], []>} : vector<16x32xf32>, vector<32x64xf32>, vector<16x64xf32> -> vector<16x64xf32>
      %c0_40 = arith.constant 0 : index
      %c0_41 = arith.constant 0 : index
      %60 = vector.load %arg9[%c0_40, %c0_41] : memref<16x64xf32, #tpu.memory_space<vmem>>, vector<16x64xf32>
      tpu.vector_store %arg9[%c0_40, %c0_41], %59 {strides = array<i32>} : memref<16x64xf32, #tpu.memory_space<vmem>>, vector<16x64xf32>,
    } else {
    }
    %c0 = arith.constant 0 : index
    %c0_1 = arith.constant 0 : index
    %c0_2 = arith.constant 0 : index
    %3 = vector.load %arg2[%c0, %c0_1, %c0_2] : memref<1x8x32xf32, #tpu.memory_space<vmem>>, vector<1x8x32xf32>
    %4 = vector.shape_cast %3 : vector<1x8x32xf32> to vector<8x32xf32>
    %c0_3 = arith.constant 0 : index
    %c0_4 = arith.constant 0 : index
    %5 = vector.load %arg4[%c0_3, %c0_4] : memref<32x32xf32, #tpu.memory_space<vmem>>, vector<32x32xf32>
    %cst = arith.constant dense<0.000000e+00> : vector<8x32xf32>
    %6 = tpu.matmul %4, %5, %cst {dimension_numbers = #tpu.dot_dimension_numbers<[1], [0], [0], [1], [0, 0, 1, 1], [], []>} : vector<8x32xf32>, vector<32x32xf32>, vector<8x32xf32> -> vector<8x32xf32>
    %7 = vector.extract_strided_slice %6 {offsets = [0, 0], sizes = [8, 16], strides = [1, 1]} : vector<8x32xf32> to vector<8x16xf32>
    %c0_5 = arith.constant 0 : index
    %c0_6 = arith.constant 0 : index
    %8 = vector.load %arg9[%c0_5, %c0_6] : memref<16x64xf32, #tpu.memory_space<vmem>>, vector<16x16xf32>
    %c0_7 = arith.constant 0 : index
    %c32 = arith.constant 32 : index
    %9 = vector.load %arg9[%c0_7, %c32] : memref<16x64xf32, #tpu.memory_space<vmem>>, vector<16x16xf32>
    %cst_8 = arith.constant dense<0.000000e+00> : vector<8x16xf32>
    %10 = tpu.matmul %7, %8, %cst_8 {dimension_numbers = #tpu.dot_dimension_numbers<[1], [1], [0], [0], [0, 0, 1, 0], [], []>} : vector<8x16xf32>, vector<16x16xf32>, vector<8x16xf32> -> vector<8x16xf32>
    %cst_9 = arith.constant dense<0xFF800000> : vector<8xf32>
    %11 = vector.multi_reduction <maximumf>, %10, %cst_9 [1] : vector<8x16xf32> to vector<8xf32>
    %12 = vector.shape_cast %11 : vector<8xf32> to vector<8x1xf32>
    %13 = vector.broadcast %12 : vector<8x1xf32> to vector<8x16xf32>
    %14 = arith.subf %10, %13 : vector<8x16xf32>
    %15 = math.exp %14 : vector<8x16xf32>
    %cst_10 = arith.constant dense<0.000000e+00> : vector<8xf32>
    %16 = vector.multi_reduction <add>, %15, %cst_10 [1] : vector<8x16xf32> to vector<8xf32>
    %17 = vector.shape_cast %16 : vector<8xf32> to vector<8x1xf32>
    %18 = tpu.reciprocal %17 {approx = true} : vector<8x1xf32> -> vector<8x1xf32>
    %19 = arith.mulf %17, %18 : vector<8x1xf32>
    %cst_11 = arith.constant 2.000000e+00 : f32
    %20 = vector.broadcast %cst_11 : f32 to vector<8x1xf32>
    %21 = arith.subf %20, %19 : vector<8x1xf32>
    %22 = arith.mulf %18, %21 : vector<8x1xf32>
    %23 = vector.broadcast %22 : vector<8x1xf32> to vector<8x16xf32>
    %24 = arith.mulf %15, %23 : vector<8x16xf32>
    %cst_12 = arith.constant dense<0.000000e+00> : vector<8x16xf32>
    %25 = tpu.matmul %24, %9, %cst_12 {dimension_numbers = #tpu.dot_dimension_numbers<[1], [0], [0], [1], [0, 0, 1, 1], [], []>} : vector<8x16xf32>, vector<16x16xf32>, vector<8x16xf32> -> vector<8x16xf32>
    %c0_13 = arith.constant 0 : index
    %c0_14 = arith.constant 0 : index
    %26 = vector.load %arg10[%c0_13, %c0_14] : memref<8x32xf32, #tpu.memory_space<vmem>>, vector<8x16xf32>
    tpu.vector_store %arg10[%c0_13, %c0_14], %25 {strides = array<i32>} : memref<8x32xf32, #tpu.memory_space<vmem>>, vector<8x16xf32>,
    %27 = vector.extract_strided_slice %6 {offsets = [0, 16], sizes = [8, 16], strides = [1, 1]} : vector<8x32xf32> to vector<8x16xf32>
    %c0_15 = arith.constant 0 : index
    %c16 = arith.constant 16 : index
    %28 = vector.load %arg9[%c0_15, %c16] : memref<16x64xf32, #tpu.memory_space<vmem>>, vector<16x16xf32>
    %c0_16 = arith.constant 0 : index
    %c48 = arith.constant 48 : index
    %29 = vector.load %arg9[%c0_16, %c48] : memref<16x64xf32, #tpu.memory_space<vmem>>, vector<16x16xf32>
    %cst_17 = arith.constant dense<0.000000e+00> : vector<8x16xf32>
    %30 = tpu.matmul %27, %28, %cst_17 {dimension_numbers = #tpu.dot_dimension_numbers<[1], [1], [0], [0], [0, 0, 1, 0], [], []>} : vector<8x16xf32>, vector<16x16xf32>, vector<8x16xf32> -> vector<8x16xf32>
    %cst_18 = arith.constant dense<0xFF800000> : vector<8xf32>
    %31 = vector.multi_reduction <maximumf>, %30, %cst_18 [1] : vector<8x16xf32> to vector<8xf32>
    %32 = vector.shape_cast %31 : vector<8xf32> to vector<8x1xf32>
    %33 = vector.broadcast %32 : vector<8x1xf32> to vector<8x16xf32>
    %34 = arith.subf %30, %33 : vector<8x16xf32>
    %35 = math.exp %34 : vector<8x16xf32>
    %cst_19 = arith.constant dense<0.000000e+00> : vector<8xf32>
    %36 = vector.multi_reduction <add>, %35, %cst_19 [1] : vector<8x16xf32> to vector<8xf32>
    %37 = vector.shape_cast %36 : vector<8xf32> to vector<8x1xf32>
    %38 = tpu.reciprocal %37 {approx = true} : vector<8x1xf32> -> vector<8x1xf32>
    %39 = arith.mulf %37, %38 : vector<8x1xf32>
    %cst_20 = arith.constant 2.000000e+00 : f32
    %40 = vector.broadcast %cst_20 : f32 to vector<8x1xf32>
    %41 = arith.subf %40, %39 : vector<8x1xf32>
    %42 = arith.mulf %38, %41 : vector<8x1xf32>
    %43 = vector.broadcast %42 : vector<8x1xf32> to vector<8x16xf32>
    %44 = arith.mulf %35, %43 : vector<8x16xf32>
    %cst_21 = arith.constant dense<0.000000e+00> : vector<8x16xf32>
    %45 = tpu.matmul %44, %29, %cst_21 {dimension_numbers = #tpu.dot_dimension_numbers<[1], [0], [0], [1], [0, 0, 1, 1], [], []>} : vector<8x16xf32>, vector<16x16xf32>, vector<8x16xf32> -> vector<8x16xf32>
    %c0_22 = arith.constant 0 : index
    %c16_23 = arith.constant 16 : index
    %46 = vector.load %arg10[%c0_22, %c16_23] : memref<8x32xf32, #tpu.memory_space<vmem>>, vector<8x16xf32>
    tpu.vector_store %arg10[%c0_22, %c16_23], %45 {strides = array<i32>} : memref<8x32xf32, #tpu.memory_space<vmem>>, vector<8x16xf32>,
    %c0_24 = arith.constant 0 : index
    %c0_25 = arith.constant 0 : index
    %47 = vector.load %arg10[%c0_24, %c0_25] : memref<8x32xf32, #tpu.memory_space<vmem>>, vector<8x32xf32>
    %c0_26 = arith.constant 0 : index
    %c0_27 = arith.constant 0 : index
    %48 = vector.load %arg6[%c0_26, %c0_27] : memref<32x32xf32, #tpu.memory_space<vmem>>, vector<32x32xf32>
    %cst_28 = arith.constant dense<0.000000e+00> : vector<8x32xf32>
    %49 = tpu.matmul %47, %48, %cst_28 {dimension_numbers = #tpu.dot_dimension_numbers<[1], [0], [0], [1], [0, 0, 1, 1], [], []>} : vector<8x32xf32>, vector<32x32xf32>, vector<8x32xf32> -> vector<8x32xf32>
    %c0_29 = arith.constant 0 : index
    %c0_30 = arith.constant 0 : index
    %50 = vector.load %arg7[%c0_29, %c0_30] : memref<1x32xf32, #tpu.memory_space<vmem>>, vector<1x32xf32>
    %51 = vector.broadcast %50 : vector<1x32xf32> to vector<8x32xf32>
    %52 = arith.addf %49, %51 : vector<8x32xf32>
    %c0_31 = arith.constant 0 : index
    %c0_32 = arith.constant 0 : index
    %c0_33 = arith.constant 0 : index
    %53 = vector.load %arg8[%c0_31, %c0_32, %c0_33] : memref<1x8x32xf32, #tpu.memory_space<vmem>>, vector<1x8x32xf32>
    %54 = vector.shape_cast %53 : vector<1x8x32xf32> to vector<8x32xf32>
    %55 = vector.shape_cast %52 : vector<8x32xf32> to vector<1x8x32xf32>
    tpu.vector_store %arg8[%c0_31, %c0_32, %c0_33], %55 {strides = array<i32>} : memref<1x8x32xf32, #tpu.memory_space<vmem>>, vector<1x8x32xf32>,
    return
  }
  func.func @transform_0(%arg0: i32, %arg1: i32) -> (i32, i32, i32) {
    %c0_i32 = arith.constant 0 : i32
    %c0_i32_0 = arith.constant 0 : i32
    return %arg0, %arg1, %c0_i32 : i32, i32, i32
  }
  func.func @transform_1(%arg0: i32, %arg1: i32) -> (i32, i32, i32) {
    %c0_i32 = arith.constant 0 : i32
    %c0_i32_0 = arith.constant 0 : i32
    %c0_i32_1 = arith.constant 0 : i32
    return %arg0, %c0_i32, %c0_i32_0 : i32, i32, i32
  }
  func.func @transform_2(%arg0: i32, %arg1: i32) -> (i32, i32) {
    %c0_i32 = arith.constant 0 : i32
    %c0_i32_0 = arith.constant 0 : i32
    %c0_i32_1 = arith.constant 0 : i32
    return %c0_i32, %c0_i32_0 : i32, i32
  }
  func.func @transform_3(%arg0: i32, %arg1: i32) -> (i32, i32) {
    %c0_i32 = arith.constant 0 : i32
    %c0_i32_0 = arith.constant 0 : i32
    %c0_i32_1 = arith.constant 0 : i32
    return %c0_i32, %c0_i32_0 : i32, i32
  }
  func.func @transform_4(%arg0: i32, %arg1: i32) -> (i32, i32) {
    %c0_i32 = arith.constant 0 : i32
    %c0_i32_0 = arith.constant 0 : i32
    %c0_i32_1 = arith.constant 0 : i32
    return %c0_i32, %c0_i32_0 : i32, i32
  }
  func.func @transform_5(%arg0: i32, %arg1: i32) -> (i32, i32) {
    %c0_i32 = arith.constant 0 : i32
    %c0_i32_0 = arith.constant 0 : i32
    %c0_i32_1 = arith.constant 0 : i32
    return %c0_i32, %c0_i32_0 : i32, i32
  }
  func.func @transform_6(%arg0: i32, %arg1: i32) -> (i32, i32, i32) {
    %c0_i32 = arith.constant 0 : i32
    %c0_i32_0 = arith.constant 0 : i32
    return %arg0, %arg1, %c0_i32 : i32, i32, i32
  }
}

module attributes {stable_mosaic.version = 11 : i64} {
  func.func @cross_attn_kernel(%arg0: i32, %arg1: i32, %arg2: memref<1x8x32xf32, #tpu.memory_space<vmem>>, %arg3: memref<1x16x32xf32, #tpu.memory_space<vmem>>, %arg4: memref<32x32xf32, #tpu.memory_space<vmem>>, %arg5: memref<32x64xf32, #tpu.memory_space<vmem>>, %arg6: memref<32x32xf32, #tpu.memory_space<vmem>>, %arg7: memref<1x32xf32, #tpu.memory_space<vmem>>, %arg8: memref<1x8x32xf32, #tpu.memory_space<vmem>>, %arg9: memref<16x64xf32, #tpu.memory_space<vmem>>, %arg10: memref<8x32xf32, #tpu.memory_space<vmem>>) attributes {dimension_semantics = [#tpu.dimension_semantics<parallel>, #tpu.dimension_semantics<arbitrary>], iteration_bounds = array<i64: 2, 3>, scalar_prefetch = 0 : i64, scratch_operands = 2 : i64, tpu.core_type = #tpu.core_type<tc>, window_params = [{transform_indices = @transform_0, window_bounds = array<i64: 1, 8, 32>}, {transform_indices = @transform_1, window_bounds = array<i64: 1, 16, 32>}, {pipeline_mode = #tpu.pipeline_mode<synchronous>, transform_indices = @transform_2, window_bounds = array<i64: 32, 32>}, {pipeline_mode = #tpu.pipeline_mode<synchronous>, transform_indices = @transform_3, window_bounds = array<i64: 32, 64>}, {pipeline_mode = #tpu.pipeline_mode<synchronous>, transform_indices = @transform_4, window_bounds = array<i64: 32, 32>}, {pipeline_mode = #tpu.pipeline_mode<synchronous>, transform_indices = @transform_5, window_bounds = array<i64: 1, 32>}, {transform_indices = @transform_6, window_bounds = array<i64: 1, 8, 32>}]} {
    %c0_i32 = arith.constant 0 : i32
    %0 = arith.cmpi eq, %arg1, %c0_i32 : i32
    %1 = arith.extui %0 : i1 to i32
    %c0_i32_0 = arith.constant 0 : i32
    %2 = arith.cmpi ne, %1, %c0_i32_0 : i32
    scf.if %2 {
      %c0_34 = arith.constant 0 : index
      %c0_35 = arith.constant 0 : index
      %c0_36 = arith.constant 0 : index
      %56 = vector.load %arg3[%c0_34, %c0_35, %c0_36] : memref<1x16x32xf32, #tpu.memory_space<vmem>>, vector<1x16x32xf32>
      %57 = vector.shape_cast %56 : vector<1x16x32xf32> to vector<16x32xf32>
      %c0_37 = arith.constant 0 : index
      %c0_38 = arith.constant 0 : index
      %58 = vector.load %arg5[%c0_37, %c0_38] : memref<32x64xf32, #tpu.memory_space<vmem>>, vector<32x64xf32>
      %cst_39 = arith.constant dense<0.000000e+00> : vector<16x64xf32>
      %59 = tpu.matmul %57, %58, %cst_39 {dimension_numbers = #tpu.dot_dimension_numbers<[1], [0], [0], [1], [0, 0, 1, 1], [], []>} : vector<16x32xf32>, vector<32x64xf32>, vector<16x64xf32> -> vector<16x64xf32>
      %c0_40 = arith.constant 0 : index
      %c0_41 = arith.constant 0 : index
      %60 = vector.load %arg9[%c0_40, %c0_41] : memref<16x64xf32, #tpu.memory_space<vmem>>, vector<16x64xf32>
      tpu.vector_store %arg9[%c0_40, %c0_41], %59 {strides = array<i32>} : memref<16x64xf32, #tpu.memory_space<vmem>>, vector<16x64xf32>,
    } else {
    }
    %c0 = arith.constant 0 : index
    %c0_1 = arith.constant 0 : index
    %c0_2 = arith.constant 0 : index
    %3 = vector.load %arg2[%c0, %c0_1, %c0_2] : memref<1x8x32xf32, #tpu.memory_space<vmem>>, vector<1x8x32xf32>
    %4 = vector.shape_cast %3 : vector<1x8x32xf32> to vector<8x32xf32>
    %c0_3 = arith.constant 0 : index
    %c0_4 = arith.constant 0 : index
    %5 = vector.load %arg4[%c0_3, %c0_4] : memref<32x32xf32, #tpu.memory_space<vmem>>, vector<32x32xf32>
    %cst = arith.constant dense<0.000000e+00> : vector<8x32xf32>
    %6 = tpu.matmul %4, %5, %cst {dimension_numbers = #tpu.dot_dimension_numbers<[1], [0], [0], [1], [0, 0, 1, 1], [], []>} : vector<8x32xf32>, vector<32x32xf32>, vector<8x32xf32> -> vector<8x32xf32>
    %7 = vector.extract_strided_slice %6 {offsets = [0, 0], sizes = [8, 16], strides = [1, 1]} : vector<8x32xf32> to vector<8x16xf32>
    %c0_5 = arith.constant 0 : index
    %c0_6 = arith.constant 0 : index
    %8 = vector.load %arg9[%c0_5, %c0_6] : memref<16x64xf32, #tpu.memory_space<vmem>>, vector<16x16xf32>
    %c0_7 = arith.constant 0 : index
    %c32 = arith.constant 32 : index
    %9 = vector.load %arg9[%c0_7, %c32] : memref<16x64xf32, #tpu.memory_space<vmem>>, vector<16x16xf32>
    %cst_8 = arith.constant dense<0.000000e+00> : vector<8x16xf32>
    %10 = tpu.matmul %7, %8, %cst_8 {dimension_numbers = #tpu.dot_dimension_numbers<[1], [1], [0], [0], [0, 0, 1, 0], [], []>} : vector<8x16xf32>, vector<16x16xf32>, vector<8x16xf32> -> vector<8x16xf32>
    %cst_9 = arith.constant dense<0xFF800000> : vector<8xf32>
    %11 = vector.multi_reduction <maximumf>, %10, %cst_9 [1] : vector<8x16xf32> to vector<8xf32>
    %12 = vector.shape_cast %11 : vector<8xf32> to vector<8x1xf32>
    %13 = vector.broadcast %12 : vector<8x1xf32> to vector<8x16xf32>
    %14 = arith.subf %10, %13 : vector<8x16xf32>
    %15 = math.exp %14 : vector<8x16xf32>
    %cst_10 = arith.constant dense<0.000000e+00> : vector<8xf32>
    %16 = vector.multi_reduction <add>, %15, %cst_10 [1] : vector<8x16xf32> to vector<8xf32>
    %17 = vector.shape_cast %16 : vector<8xf32> to vector<8x1xf32>
    %18 = tpu.reciprocal %17 {approx = true} : vector<8x1xf32> -> vector<8x1xf32>
    %19 = arith.mulf %17, %18 : vector<8x1xf32>
    %cst_11 = arith.constant 2.000000e+00 : f32
    %20 = vector.broadcast %cst_11 : f32 to vector<8x1xf32>
    %21 = arith.subf %20, %19 : vector<8x1xf32>
    %22 = arith.mulf %18, %21 : vector<8x1xf32>
    %23 = vector.broadcast %22 : vector<8x1xf32> to vector<8x16xf32>
    %24 = arith.mulf %15, %23 : vector<8x16xf32>
    %cst_12 = arith.constant dense<0.000000e+00> : vector<8x16xf32>
    %25 = tpu.matmul %24, %9, %cst_12 {dimension_numbers = #tpu.dot_dimension_numbers<[1], [0], [0], [1], [0, 0, 1, 1], [], []>} : vector<8x16xf32>, vector<16x16xf32>, vector<8x16xf32> -> vector<8x16xf32>
    %c0_13 = arith.constant 0 : index
    %c0_14 = arith.constant 0 : index
    %26 = vector.load %arg10[%c0_13, %c0_14] : memref<8x32xf32, #tpu.memory_space<vmem>>, vector<8x16xf32>
    tpu.vector_store %arg10[%c0_13, %c0_14], %25 {strides = array<i32>} : memref<8x32xf32, #tpu.memory_space<vmem>>, vector<8x16xf32>,
    %27 = vector.extract_strided_slice %6 {offsets = [0, 16], sizes = [8, 16], strides = [1, 1]} : vector<8x32xf32> to vector<8x16xf32>
    %c0_15 = arith.constant 0 : index
    %c16 = arith.constant 16 : index
    %28 = vector.load %arg9[%c0_15, %c16] : memref<16x64xf32, #tpu.memory_space<vmem>>, vector<16x16xf32>
    %c0_16 = arith.constant 0 : index
    %c48 = arith.constant 48 : index
    %29 = vector.load %arg9[%c0_16, %c48] : memref<16x64xf32, #tpu.memory_space<vmem>>, vector<16x16xf32>
    %cst_17 = arith.constant dense<0.000000e+00> : vector<8x16xf32>
    %30 = tpu.matmul %27, %28, %cst_17 {dimension_numbers = #tpu.dot_dimension_numbers<[1], [1], [0], [0], [0, 0, 1, 0], [], []>} : vector<8x16xf32>, vector<16x16xf32>, vector<8x16xf32> -> vector<8x16xf32>
    %cst_18 = arith.constant dense<0xFF800000> : vector<8xf32>
    %31 = vector.multi_reduction <maximumf>, %30, %cst_18 [1] : vector<8x16xf32> to vector<8xf32>
    %32 = vector.shape_cast %31 : vector<8xf32> to vector<8x1xf32>
    %33 = vector.broadcast %32 : vector<8x1xf32> to vector<8x16xf32>
    %34 = arith.subf %30, %33 : vector<8x16xf32>
    %35 = math.exp %34 : vector<8x16xf32>
    %cst_19 = arith.constant dense<0.000000e+00> : vector<8xf32>
    %36 = vector.multi_reduction <add>, %35, %cst_19 [1] : vector<8x16xf32> to vector<8xf32>
    %37 = vector.shape_cast %36 : vector<8xf32> to vector<8x1xf32>
    %38 = tpu.reciprocal %37 {approx = true} : vector<8x1xf32> -> vector<8x1xf32>
    %39 = arith.mulf %37, %38 : vector<8x1xf32>
    %cst_20 = arith.constant 2.000000e+00 : f32
    %40 = vector.broadcast %cst_20 : f32 to vector<8x1xf32>
    %41 = arith.subf %40, %39 : vector<8x1xf32>
    %42 = arith.mulf %38, %41 : vector<8x1xf32>
    %43 = vector.broadcast %42 : vector<8x1xf32> to vector<8x16xf32>
    %44 = arith.mulf %35, %43 : vector<8x16xf32>
    %cst_21 = arith.constant dense<0.000000e+00> : vector<8x16xf32>
    %45 = tpu.matmul %44, %29, %cst_21 {dimension_numbers = #tpu.dot_dimension_numbers<[1], [0], [0], [1], [0, 0, 1, 1], [], []>} : vector<8x16xf32>, vector<16x16xf32>, vector<8x16xf32> -> vector<8x16xf32>
    %c0_22 = arith.constant 0 : index
    %c16_23 = arith.constant 16 : index
    %46 = vector.load %arg10[%c0_22, %c16_23] : memref<8x32xf32, #tpu.memory_space<vmem>>, vector<8x16xf32>
    tpu.vector_store %arg10[%c0_22, %c16_23], %45 {strides = array<i32>} : memref<8x32xf32, #tpu.memory_space<vmem>>, vector<8x16xf32>,
    %c0_24 = arith.constant 0 : index
    %c0_25 = arith.constant 0 : index
    %47 = vector.load %arg10[%c0_24, %c0_25] : memref<8x32xf32, #tpu.memory_space<vmem>>, vector<8x32xf32>
    %c0_26 = arith.constant 0 : index
    %c0_27 = arith.constant 0 : index
    %48 = vector.load %arg6[%c0_26, %c0_27] : memref<32x32xf32, #tpu.memory_space<vmem>>, vector<32x32xf32>
    %cst_28 = arith.constant dense<0.000000e+00> : vector<8x32xf32>
    %49 = tpu.matmul %47, %48, %cst_28 {dimension_numbers = #tpu.dot_dimension_numbers<[1], [0], [0], [1], [0, 0, 1, 1], [], []>} : vector<8x32xf32>, vector<32x32xf32>, vector<8x32xf32> -> vector<8x32xf32>
    %c0_29 = arith.constant 0 : index
    %c0_30 = arith.constant 0 : index
    %50 = vector.load %arg7[%c0_29, %c0_30] : memref<1x32xf32, #tpu.memory_space<vmem>>, vector<1x32xf32>
    %51 = vector.broadcast %50 : vector<1x32xf32> to vector<8x32xf32>
    %52 = arith.addf %49, %51 : vector<8x32xf32>
    %c0_31 = arith.constant 0 : index
    %c0_32 = arith.constant 0 : index
    %c0_33 = arith.constant 0 : index
    %53 = vector.load %arg8[%c0_31, %c0_32, %c0_33] : memref<1x8x32xf32, #tpu.memory_space<vmem>>, vector<1x8x32xf32>
    %54 = vector.shape_cast %53 : vector<1x8x32xf32> to vector<8x32xf32>
    %55 = vector.shape_cast %52 : vector<8x32xf32> to vector<1x8x32xf32>
    tpu.vector_store %arg8[%c0_31, %c0_32, %c0_33], %55 {strides = array<i32>} : memref<1x8x32xf32, #tpu.memory_space<vmem>>, vector<1x8x32xf32>,
    return
  }
  func.func @transform_0(%arg0: i32, %arg1: i32) -> (i32, i32, i32) {
    %c0_i32 = arith.constant 0 : i32
    %c0_i32_0 = arith.constant 0 : i32
    return %arg0, %arg1, %c0_i32 : i32, i32, i32
  }
  func.func @transform_1(%arg0: i32, %arg1: i32) -> (i32, i32, i32) {
    %c0_i32 = arith.constant 0 : i32
    %c0_i32_0 = arith.constant 0 : i32
    %c0_i32_1 = arith.constant 0 : i32
    return %arg0, %c0_i32, %c0_i32_0 : i32, i32, i32
  }
  func.func @transform_2(%arg0: i32, %arg1: i32) -> (i32, i32) {
    %c0_i32 = arith.constant 0 : i32
    %c0_i32_0 = arith.constant 0 : i32
    %c0_i32_1 = arith.constant 0 : i32
    return %c0_i32, %c0_i32_0 : i32, i32
  }
  func.func @transform_3(%arg0: i32, %arg1: i32) -> (i32, i32) {
    %c0_i32 = arith.constant 0 : i32
    %c0_i32_0 = arith.constant 0 : i32
    %c0_i32_1 = arith.constant 0 : i32
    return %c0_i32, %c0_i32_0 : i32, i32
  }
  func.func @transform_4(%arg0: i32, %arg1: i32) -> (i32, i32) {
    %c0_i32 = arith.constant 0 : i32
    %c0_i32_0 = arith.constant 0 : i32
    %c0_i32_1 = arith.constant 0 : i32
    return %c0_i32, %c0_i32_0 : i32, i32
  }
  func.func @transform_5(%arg0: i32, %arg1: i32) -> (i32, i32) {
    %c0_i32 = arith.constant 0 : i32
    %c0_i32_0 = arith.constant 0 : i32
    %c0_i32_1 = arith.constant 0 : i32
    return %c0_i32, %c0_i32_0 : i32, i32
  }
  func.func @transform_6(%arg0: i32, %arg1: i32) -> (i32, i32, i32) {
    %c0_i32 = arith.constant 0 : i32
    %c0_i32_0 = arith.constant 0 : i32
    return %arg0, %arg1, %c0_i32 : i32, i32, i32
  }
}

</mosaic_0001>

<llo_original>
// kernel: tpu_custom_call.1
$region0: #{tpu_custom_call.1}
  #allocation0 [shape = 'u32[]', space=smem, size = 0x4, offset = 0x4, fixed_abs, tag = 'smem constant byte address 0x4 - core index']
  #allocation1 [shape = 'u32[144,128]{1,0:T(1,128)}', space=vmem, size = 0x12000, scoped, tag = 'internal scratch']
  #allocation2 [shape = 'f32[16,64]{1,0:T(8,128)}', space=vmem, size = 0x2000, scoped, tag = 'scratch operand']
  #allocation3 [shape = 'f32[8,32]{1,0:T(8,128)}', space=vmem, size = 0x1000, scoped, tag = 'scratch operand']
  %s0 = inlined_call_operand.hbm [shape: f32[2,24,32], index: 0, kind: input, shape index: {}]
  %s1 = inlined_call_operand.hbm [shape: f32[2,16,32], index: 1, kind: input, shape index: {}]
  %s2 = inlined_call_operand.hbm [shape: f32[32,32], index: 2, kind: input, shape index: {}]
  %s3 = inlined_call_operand.hbm [shape: f32[32,64], index: 3, kind: input, shape index: {}]
  %s4 = inlined_call_operand.hbm [shape: f32[32,32], index: 4, kind: input, shape index: {}]
  %s5 = inlined_call_operand.vmem [shape: f32[1,32], index: 5, kind: input, shape index: {}]
  %s6 = inlined_call_operand.hbm [shape: f32[2,24,32], index: 6, kind: output, shape index: {}]
  %s7 = sld [smem:[#allocation0]]
  $region81: #{tpu_custom_call.1} parent=0
    _
  %s9 = ssub.s32 1, %s7
  %s10 = scalar_select 0, %s9, %s7
  $region1: #{tpu_custom_call.1} parent=0
    #allocation4 [shape = 'u8[8192]{0}', space=vmem, size = 0x2000, scoped, tag = 'input window, operand 0']
    #allocation5 [shape = 's32[2]{0}', space=sflag, size = 0x8, scoped, tag = 'scoped memory for tpu_custom_call.1']
    #allocation6 [shape = 's32[2]{0}', space=sflag, size = 0x8, scoped, tag = 'scoped memory for tpu_custom_call.1']
    #allocation7 [shape = 'u8[8192]{0}', space=vmem, size = 0x2000, scoped, tag = 'input window, operand 1, single buffered']
    #allocation8 [shape = 's32[1]{0}', space=sflag, size = 0x4, scoped, tag = 'scoped memory for tpu_custom_call.1']
    #allocation9 [shape = 'u8[16384]{0}', space=vmem, size = 0x4000, scoped, tag = 'input window, operand 2, single buffered']
    #allocation10 [shape = 'u8[16384]{0}', space=vmem, size = 0x4000, scoped, tag = 'input window, operand 3, single buffered']
    #allocation11 [shape = 's32[1]{0}', space=sflag, size = 0x4, scoped, tag = 'scoped memory for tpu_custom_call.1']
    #allocation12 [shape = 'u8[16384]{0}', space=vmem, size = 0x4000, scoped, tag = 'input window, operand 4, single buffered']
    #allocation13 [shape = 'u8[8192]{0}', space=vmem, size = 0x2000, scoped, tag = 'output window, operand 0']
    %11 = vsyncpa [#allocation5], 0
    %s12 = scalar_lea.sflag [#allocation5], 1
    %13 = vsyncpa %s12, 0
    %14 = vsyncpa [#allocation8], 0
    %15 = vsyncpa [#allocation11], 0
    %16 = vsyncpa [#allocation6], 0
    %s17 = scalar_lea.sflag [#allocation6], 1
    %18 = vsyncpa %s17, 0
    loop: start=0, step=1, limit=8
    $region2: #{tpu_custom_call.1} parent=1 // loop_pre_header
      _
    $region3: #{tpu_custom_call.1} parent=1 // loop_header
      %s20 = sphi 0, %s24
      %p21 = scmp.ge.s32.totalorder %s20, 8
      %s27 = sphi 0, %s39
      %s28 = sphi 0, %s35
      %s29 = sphi 0, %s27
      %s30 = sphi 0, %s28
      %s31 = sphi 0, %s29
      %s32 = sphi 0, %s30
      %s44 = sphi 0, %s46
      %s47 = sphi 0, %s44
      %s48 = sphi 0, %s47
      %s64 = sphi 0, %s48
      %s70 = sphi 0, %s72
      %s73 = sphi 0, %s70
      %s74 = sphi 0, %s73
      %s90 = sphi 0, %s74
      %s94 = sphi 0, %s94
      %s96 = sphi 0, %s94
      %s97 = sphi 0, %s96
      %s111 = sphi 0, %s97
      %s115 = sphi 0, %s115
      %s117 = sphi 0, %s115
      %s118 = sphi 0, %s117
      %s132 = sphi 0, %s118
      %s136 = sphi 0, %s136
      %s138 = sphi 0, %s136
      %s139 = sphi 0, %s138
      %s153 = sphi 0, %s139
      %s157 = sphi 0, %s157
      %s159 = sphi 0, %s157
      %s160 = sphi 0, %s159
      %s174 = sphi 0, %s160
      %s182 = sphi 0, %s184
      %s185 = sphi 0, %s182
      %s186 = sphi 0, %s185
      %s202 = sphi 0, %s186
    $region4: #{tpu_custom_call.1} parent=1 // loop_header_branch
      %23 = sbr.rel (%p21) target = $region8
    $region5: #{tpu_custom_call.1} parent=1 // loop_body
      %s25 = ssub.s32 %s20, 1
      %s26 = ssub.s32 %s20, 2
      %s33 = sadd.s32 1, %s28
      %p34 = scmp.ge.s32.totalorder %s33, 3
      %s35 = scalar_select %p34, 0, %s33
      %s36 = sadd.s32 1, %s27
      %s37 = scalar_select %p34, %s36, %s27
      %p38 = scmp.ge.s32.totalorder %s37, 2
      %s39 = scalar_select %p38, 0, %s37
      %s40 = ssub.s32 %s27, %s39
      %s41 = ssub.s32 %s28, %s35
      %s42 = sor.u32 %s40, %s41
      %p43 = scmp.eq.s32.totalorder %s42, 0
      %s45 = sadd.s32 %s44, 1
      %s46 = scalar_select %p43, %s44, %s45
      %p49 = pneg %p43
      %p50 = scmp.eq.s32.totalorder %s20, 5
      %p51 = por %p49, %p50
      %p52 = scmp.ne.s32.totalorder %s44, %s47
      %p53 = scmp.eq.s32.totalorder %s20, 0
      %p54 = por %p52, %p53
      %p55 = scmp.ne.s32.totalorder %s44, %s47
      %p56 = scmp.eq.s32.totalorder %s25, 5
      %p57 = por %p55, %p56
      %p58 = scmp.ne.s32.totalorder %s47, %s48
      %p59 = scmp.eq.s32.totalorder %s25, 0
      %p60 = por %p58, %p59
      %p61 = scmp.ne.s32.totalorder %s47, %s48
      %p62 = scmp.eq.s32.totalorder %s26, 5
      %p63 = por %p61, %p62
      %p65 = scmp.ne.s32.totalorder %s48, %s64
      %p66 = scmp.eq.s32.totalorder %s26, 0
      %p67 = por %p65, %p66
      %s68 = ssub.s32 %s27, %s39
      %p69 = scmp.eq.s32.totalorder %s68, 0
      %s71 = sadd.s32 %s70, 1
      %s72 = scalar_select %p69, %s70, %s71
      %p75 = pneg %p69
      %p76 = scmp.eq.s32.totalorder %s20, 5
      %p77 = por %p75, %p76
      %p78 = scmp.ne.s32.totalorder %s70, %s73
      %p79 = scmp.eq.s32.totalorder %s20, 0
      %p80 = por %p78, %p79
      %p81 = scmp.ne.s32.totalorder %s70, %s73
      %p82 = scmp.eq.s32.totalorder %s25, 5
      %p83 = por %p81, %p82
      %p84 = scmp.ne.s32.totalorder %s73, %s74
      %p85 = scmp.eq.s32.totalorder %s25, 0
      %p86 = por %p84, %p85
      %p87 = scmp.ne.s32.totalorder %s73, %s74
      %p88 = scmp.eq.s32.totalorder %s26, 5
      %p89 = por %p87, %p88
      %p91 = scmp.ne.s32.totalorder %s74, %s90
      %p92 = scmp.eq.s32.totalorder %s26, 0
      %p93 = por %p91, %p92
      %s95 = sadd.s32 %s94, 1
      %p98 = scmp.eq.s32.totalorder %s20, 5
      %p99 = scmp.ne.s32.totalorder %s94, %s96
      %p100 = scmp.eq.s32.totalorder %s20, 0
      %p101 = por %p99, %p100
      %p102 = scmp.ne.s32.totalorder %s94, %s96
      %p103 = scmp.eq.s32.totalorder %s25, 5
      %p104 = por %p102, %p103
      %p105 = scmp.ne.s32.totalorder %s96, %s97
      %p106 = scmp.eq.s32.totalorder %s25, 0
      %p107 = por %p105, %p106
      %p108 = scmp.ne.s32.totalorder %s96, %s97
      %p109 = scmp.eq.s32.totalorder %s26, 5
      %p110 = por %p108, %p109
      %p112 = scmp.ne.s32.totalorder %s97, %s111
      %p113 = scmp.eq.s32.totalorder %s26, 0
      %p114 = por %p112, %p113
      %s116 = sadd.s32 %s115, 1
      %p119 = scmp.eq.s32.totalorder %s20, 5
      %p120 = scmp.ne.s32.totalorder %s115, %s117
      %p121 = scmp.eq.s32.totalorder %s20, 0
      %p122 = por %p120, %p121
      %p123 = scmp.ne.s32.totalorder %s115, %s117
      %p124 = scmp.eq.s32.totalorder %s25, 5
      %p125 = por %p123, %p124
      %p126 = scmp.ne.s32.totalorder %s117, %s118
      %p127 = scmp.eq.s32.totalorder %s25, 0
      %p128 = por %p126, %p127
      %p129 = scmp.ne.s32.totalorder %s117, %s118
      %p130 = scmp.eq.s32.totalorder %s26, 5
      %p131 = por %p129, %p130
      %p133 = scmp.ne.s32.totalorder %s118, %s132
      %p134 = scmp.eq.s32.totalorder %s26, 0
      %p135 = por %p133, %p134
      %s137 = sadd.s32 %s136, 1
      %p140 = scmp.eq.s32.totalorder %s20, 5
      %p141 = scmp.ne.s32.totalorder %s136, %s138
      %p142 = scmp.eq.s32.totalorder %s20, 0
      %p143 = por %p141, %p142
      %p144 = scmp.ne.s32.totalorder %s136, %s138
      %p145 = scmp.eq.s32.totalorder %s25, 5
      %p146 = por %p144, %p145
      %p147 = scmp.ne.s32.totalorder %s138, %s139
      %p148 = scmp.eq.s32.totalorder %s25, 0
      %p149 = por %p147, %p148
      %p150 = scmp.ne.s32.totalorder %s138, %s139
      %p151 = scmp.eq.s32.totalorder %s26, 5
      %p152 = por %p150, %p151
      %p154 = scmp.ne.s32.totalorder %s139, %s153
      %p155 = scmp.eq.s32.totalorder %s26, 0
      %p156 = por %p154, %p155
      %s158 = sadd.s32 %s157, 1
      %p161 = scmp.eq.s32.totalorder %s20, 5
      %p162 = scmp.ne.s32.totalorder %s157, %s159
      %p163 = scmp.eq.s32.totalorder %s20, 0
      %p164 = por %p162, %p163
      %p165 = scmp.ne.s32.totalorder %s157, %s159
      %p166 = scmp.eq.s32.totalorder %s25, 5
      %p167 = por %p165, %p166
      %p168 = scmp.ne.s32.totalorder %s159, %s160
      %p169 = scmp.eq.s32.totalorder %s25, 0
      %p170 = por %p168, %p169
      %p171 = scmp.ne.s32.totalorder %s159, %s160
      %p172 = scmp.eq.s32.totalorder %s26, 5
      %p173 = por %p171, %p172
      %p175 = scmp.ne.s32.totalorder %s160, %s174
      %p176 = scmp.eq.s32.totalorder %s26, 0
      %p177 = por %p175, %p176
      %s178 = ssub.s32 %s27, %s39
      %s179 = ssub.s32 %s28, %s35
      %s180 = sor.u32 %s178, %s179
      %p181 = scmp.eq.s32.totalorder %s180, 0
      %s183 = sadd.s32 %s182, 1
      %s184 = scalar_select %p181, %s182, %s183
      %p187 = pneg %p181
      %p188 = scmp.eq.s32.totalorder %s20, 5
      %p189 = por %p187, %p188
      %p190 = scmp.ne.s32.totalorder %s182, %s185
      %p191 = scmp.eq.s32.totalorder %s20, 0
      %p192 = por %p190, %p191
      %p193 = scmp.ne.s32.totalorder %s182, %s185
      %p194 = scmp.eq.s32.totalorder %s25, 5
      %p195 = por %p193, %p194
      %p196 = scmp.ne.s32.totalorder %s185, %s186
      %p197 = scmp.eq.s32.totalorder %s25, 0
      %p198 = por %p196, %p197
      %p199 = scmp.ne.s32.totalorder %s185, %s186
      %p200 = scmp.eq.s32.totalorder %s26, 5
      %p201 = por %p199, %p200
      %p203 = scmp.ne.s32.totalorder %s186, %s202
      %p204 = scmp.eq.s32.totalorder %s26, 0
      %p205 = por %p203, %p204
      %p206 = scmp.le.s32.totalorder 1, %s20
      %p207 = scmp.lt.s32.totalorder %s20, 7
      %p208 = pnand %p206, %p207
      %p209 = pneg %p208
      // Predicated region
      $region9: #{tpu_custom_call.1} parent=5 // pred_check
        _
      $region10: #{tpu_custom_call.1} parent=5 // pred_check_branch
        %211 = sbr.rel (%p208) target = $region12
      $region11: #{tpu_custom_call.1} parent=5 // pred_region
        %s212 = ssub.s32 %s20, 1
        // Predicated region
        $region13: #{tpu_custom_call.1} parent=11 // pred_check
          %p213 = pneg %p86
        $region14: #{tpu_custom_call.1} parent=11 // pred_check_branch
          %215 = sbr.rel (%p213) target = $region16
        $region15: #{tpu_custom_call.1} parent=11 // pred_region
          %s217 = ssub.s32 256, 256
          %218 = vsyncadd [#allocation8], %s217
          %s219 = smul.addr %s29, 2
          %s220 = smul.addr %s219, 128
          %s221 = scalar_lea.hbm %s1, %s220
          %s222 = sshll.u32 [#allocation7], 4
          %s223 = int_to_ptr.vmem [resolvable:$true] %s222
          %228 = dma.hbm_to_vmem [thread:$0]  %s221, 256, %s223, [#allocation8], 128, 128, 8
        $region16: #{tpu_custom_call.1} parent=11 // pred_fallthru
          _
        // Predicated region
        $region17: #{tpu_custom_call.1} parent=11 // pred_check
          %p229 = pneg %p107
        $region18: #{tpu_custom_call.1} parent=11 // pred_check_branch
          %231 = sbr.rel (%p229) target = $region20
        $region19: #{tpu_custom_call.1} parent=11 // pred_region
          %s233 = ssub.s32 512, 512
          %234 = vsyncadd [#allocation8], %s233
          %s235 = sshll.u32 [#allocation9], 4
          %s236 = int_to_ptr.vmem [resolvable:$true] %s235
          %241 = dma.hbm_to_vmem [thread:$0]  %s2, 512, %s236, [#allocation8], 128, 128, 8
        $region20: #{tpu_custom_call.1} parent=11 // pred_fallthru
          _
        // Predicated region
        $region21: #{tpu_custom_call.1} parent=11 // pred_check
          %p242 = pneg %p128
        $region22: #{tpu_custom_call.1} parent=11 // pred_check_branch
          %244 = sbr.rel (%p242) target = $region24
        $region23: #{tpu_custom_call.1} parent=11 // pred_region
          %s246 = ssub.s32 512, 512
          %247 = vsyncadd [#allocation11], %s246
          %s248 = sshll.u32 [#allocation10], 4
          %s249 = int_to_ptr.vmem [resolvable:$true] %s248
          %254 = dma.hbm_to_vmem [thread:$0]  %s3, 512, %s249, [#allocation11], 128, 128, 8
        $region24: #{tpu_custom_call.1} parent=11 // pred_fallthru
          _
        // Predicated region
        $region25: #{tpu_custom_call.1} parent=11 // pred_check
          %p255 = pneg %p149
        $region26: #{tpu_custom_call.1} parent=11 // pred_check_branch
          %257 = sbr.rel (%p255) target = $region28
        $region27: #{tpu_custom_call.1} parent=11 // pred_region
          %s259 = ssub.s32 512, 512
          %260 = vsyncadd [#allocation11], %s259
          %s261 = sshll.u32 [#allocation12], 4
          %s262 = int_to_ptr.vmem [resolvable:$true] %s261
          %267 = dma.hbm_to_vmem [thread:$0]  %s4, 512, %s262, [#allocation11], 128, 128, 8
        $region28: #{tpu_custom_call.1} parent=11 // pred_fallthru
          _
        // Predicated region
        $region29: #{tpu_custom_call.1} parent=11 // pred_check
          %p268 = pneg %p170
        $region30: #{tpu_custom_call.1} parent=11 // pred_check_branch
          %270 = sbr.rel (%p268) target = $region32
        $region31: #{tpu_custom_call.1} parent=11 // pred_region
          _
        $region32: #{tpu_custom_call.1} parent=11 // pred_fallthru
          _
      $region12: #{tpu_custom_call.1} parent=5 // pred_fallthru
        _
      %p271 = scmp.lt.s32.totalorder %s20, 6
      // Predicated region
      $region33: #{tpu_custom_call.1} parent=5 // pred_check
        %p272 = pneg %p271
      $region34: #{tpu_custom_call.1} parent=5 // pred_check_branch
        %274 = sbr.rel (%p272) target = $region36
      $region35: #{tpu_custom_call.1} parent=5 // pred_region
        // Predicated region
        $region37: #{tpu_custom_call.1} parent=35 // pred_check
          %p275 = pneg %p54
        $region38: #{tpu_custom_call.1} parent=35 // pred_check_branch
          %277 = sbr.rel (%p275) target = $region40
        $region39: #{tpu_custom_call.1} parent=35 // pred_region
          %s278 = sand.u32 %s44, 1
          %s279 = scalar_lea.sflag [#allocation5], %s278
          %s280 = sand.u32 %s44, 1
          %s281 = smul.addr %s280, 8
          %s282 = scalar_lea.vmem [#allocation4], %s281
          %s284 = ssub.s32 128, 128
          %285 = vsyncadd %s279, %s284
          %s286 = smul.addr %s27, 3
          %s287 = sadd.s32 %s28, %s286
          %s288 = smul.addr %s287, 128
          %s289 = scalar_lea.hbm %s0, %s288
          %s291 = sshll.u32 %s282, 4
          %s292 = int_to_ptr.vmem [resolvable:$true] %s291
          %294 = dma.hbm_to_vmem [thread:$0]  %s289, 128, %s292, %s279
        $region40: #{tpu_custom_call.1} parent=35 // pred_fallthru
          _
      $region36: #{tpu_custom_call.1} parent=5 // pred_fallthru
        _
      %p295 = scmp.le.s32.totalorder 1, %s20
      %p296 = scmp.lt.s32.totalorder %s20, 7
      %p297 = pnand %p295, %p296
      %p298 = pneg %p297
      // Predicated region
      $region41: #{tpu_custom_call.1} parent=5 // pred_check
        _
      $region42: #{tpu_custom_call.1} parent=5 // pred_check_branch
        %300 = sbr.rel (%p297) target = $region44
      $region43: #{tpu_custom_call.1} parent=5 // pred_region
        %s301 = ssub.s32 %s20, 1
        %s302 = sand.u32 %s47, 1
        %s303 = scalar_lea.sflag [#allocation5], %s302
        %s304 = sand.u32 %s47, 1
        %s305 = smul.addr %s304, 8
        %s306 = scalar_lea.vmem [#allocation4], %s305
        // Predicated region
        $region45: #{tpu_custom_call.1} parent=43 // pred_check
          %p307 = pneg %p60
        $region46: #{tpu_custom_call.1} parent=43 // pred_check_branch
          %309 = sbr.rel (%p307) target = $region48
        $region47: #{tpu_custom_call.1} parent=43 // pred_region
          %310 = dma.done %s303, 128
        $region48: #{tpu_custom_call.1} parent=43 // pred_fallthru
          _
        // Predicated region
        $region49: #{tpu_custom_call.1} parent=43 // pred_check
          %p311 = pneg %p86
        $region50: #{tpu_custom_call.1} parent=43 // pred_check_branch
          %313 = sbr.rel (%p311) target = $region52
        $region51: #{tpu_custom_call.1} parent=43 // pred_region
          %314 = dma.done [#allocation8], 256
        $region52: #{tpu_custom_call.1} parent=43 // pred_fallthru
          _
        // Predicated region
        $region53: #{tpu_custom_call.1} parent=43 // pred_check
          %p315 = pneg %p107
        $region54: #{tpu_custom_call.1} parent=43 // pred_check_branch
          %317 = sbr.rel (%p315) target = $region56
        $region55: #{tpu_custom_call.1} parent=43 // pred_region
          %318 = dma.done [#allocation8], 512
        $region56: #{tpu_custom_call.1} parent=43 // pred_fallthru
          _
        // Predicated region
        $region57: #{tpu_custom_call.1} parent=43 // pred_check
          %p319 = pneg %p128
        $region58: #{tpu_custom_call.1} parent=43 // pred_check_branch
          %321 = sbr.rel (%p319) target = $region60
        $region59: #{tpu_custom_call.1} parent=43 // pred_region
          %322 = dma.done [#allocation11], 512
        $region60: #{tpu_custom_call.1} parent=43 // pred_fallthru
          _
        // Predicated region
        $region61: #{tpu_custom_call.1} parent=43 // pred_check
          %p323 = pneg %p149
        $region62: #{tpu_custom_call.1} parent=43 // pred_check_branch
          %325 = sbr.rel (%p323) target = $region64
        $region63: #{tpu_custom_call.1} parent=43 // pred_region
          %326 = dma.done [#allocation11], 512
        $region64: #{tpu_custom_call.1} parent=43 // pred_fallthru
          _
        %s327 = sand.u32 %s47, 1
        %s328 = scalar_lea.sflag [#allocation5], %s327
        %s329 = sand.u32 %s47, 1
        %s330 = smul.addr %s329, 8
        %s331 = scalar_lea.vmem [#allocation4], %s330
        %p332 = pneg %p60
        %p333 = pneg %p57
        %p334 = pneg %p86
        %p335 = pneg %p83
        %p336 = pneg %p107
        %p337 = pneg %p104
        %p338 = pneg %p128
        %p339 = pneg %p125
        %p340 = pneg %p149
        %p341 = pneg %p146
        %p342 = pneg %p170
        %p343 = pneg %p167
        %p344 = pneg %p198
        %p345 = pneg %p195
        %s346 = sand.u32 %s185, 1
        %s347 = scalar_lea.sflag [#allocation6], %s346
        %s348 = sand.u32 %s185, 1
        %s349 = smul.addr %s348, 8
        %s350 = scalar_lea.vmem [#allocation13], %s349
        %p351 = scmp.eq.s32.totalorder %s30, 0
        // Predicated region
        $region65: #{tpu_custom_call.1} parent=43 // pred_check
          %p352 = pneg %p351
        $region66: #{tpu_custom_call.1} parent=43 // pred_check_branch
          %354 = sbr.rel (%p352) target = $region68
        $region67: #{tpu_custom_call.1} parent=43 // pred_region
          %v355 = vld [vmem:[#allocation7] sm:$0xff]
          %v356 = vld [vmem:[#allocation7 + $0x8] sm:$0xff]
          %v357 = vld [vmem:[#allocation10] sm:$0xff]
          %v358 = vld [vmem:[#allocation10 + $0x8] sm:$0xff]
          %v359 = vld [vmem:[#allocation10 + $0x10] sm:$0xff]
          %v360 = vld [vmem:[#allocation10 + $0x18] sm:$0xff]
          %vm361 = vcmask 261120
          %v363 = vsel %vm361, %v355, 0
          %v366 = vsel %vm361, %v356, 0
          %368 = vmatprep.subr.mxu0 0.0
          %369 = vmatpush1.msra.mxu0 %v357
          %370 = vmatprep.subr.mxu0 0.0
          %371 = vmatpush1.msra.mxu0 %v358
          %372 = vmatprep.subr.mxu0 0.0
          %373 = vmatpush1.msra.mxu0 %v359
          %374 = vmatprep.subr.mxu0 0.0
          %375 = vmatpush1.msra.mxu0 %v360
          %376 = vmatprep.subr.mxu0 0.0
          %377 = vmatpush1.msra.mxu0 0.0
          %378 = vmatprep.subr.mxu0 0.0
          %379 = vmatpush1.msra.mxu0 0.0
          %380 = vmatprep.subr.mxu0 0.0
          %381 = vmatpush1.msra.mxu0 0.0
          %382 = vmatprep.subr.mxu0 0.0
          %383 = vmatpush1.msra.mxu0 0.0
          %384 = vmatprep.subr.mxu0 0.0
          %385 = vmatpush1.msra.mxu0 0.0
          %386 = vmatprep.subr.mxu0 0.0
          %387 = vmatpush1.msra.mxu0 0.0
          %388 = vmatprep.subr.mxu0 0.0
          %389 = vmatpush1.msra.mxu0 0.0
          %390 = vmatprep.subr.mxu0 0.0
          %391 = vmatpush1.msra.mxu0 0.0
          %392 = vmatprep.subr.mxu0 0.0
          %393 = vmatpush1.msra.mxu0 0.0
          %394 = vmatprep.subr.mxu0 0.0
          %395 = vmatpush1.msra.mxu0 0.0
          %396 = vmatprep.subr.mxu0 0.0
          %397 = vmatpush1.msra.mxu0 0.0
          %398 = vmatprep.subr.mxu0 0.0
          %399 = vmatpush1.msra.mxu0 0.0
          %400 = vmatprep.subr.mxu0 0.0
          %401 = vmatpush1.msra.mxu0 0.0
          %402 = vmatprep.subr.mxu0 0.0
          %403 = vmatpush1.msra.mxu0 0.0
          %404 = vmatprep.subr.mxu0 0.0
          %405 = vmatpush1.msra.mxu0 0.0
          %406 = vmatprep.subr.mxu0 0.0
          %407 = vmatpush1.msra.mxu0 0.0
          %408 = vmatprep.subr.mxu0 0.0
          %409 = vmatpush1.msra.mxu0 0.0
          %410 = vmatprep.subr.mxu0 0.0
          %411 = vmatpush1.msra.mxu0 0.0
          %412 = vmatprep.subr.mxu0 0.0
          %413 = vmatpush1.msra.mxu0 0.0
          %414 = vmatprep.subr.mxu0 0.0
          %415 = vmatpush1.msra.mxu0 0.0
          %416 = vmatprep.subr.mxu0 0.0
          %417 = vmatpush1.msra.mxu0 0.0
          %418 = vmatprep.subr.mxu0 0.0
          %419 = vmatpush1.msra.mxu0 0.0
          %420 = vmatprep.subr.mxu0 0.0
          %421 = vmatpush1.msra.mxu0 0.0
          %422 = vmatprep.subr.mxu0 0.0
          %423 = vmatpush1.msra.mxu0 0.0
          %424 = vmatprep.subr.mxu0 0.0
          %425 = vmatpush1.msra.mxu0 0.0
          %426 = vmatprep.subr.mxu0 0.0
          %427 = vmatpush1.msra.mxu0 0.0
          %428 = vmatprep.subr.mxu0 0.0
          %429 = vmatpush1.msra.mxu0 0.0
          %430 = vmatprep.subr.mxu0 0.0
          %431 = vmatpush1.msra.mxu0 0.0
          %432 = vmatprep.mubr.f32.mxu0 0.0
          %433 = vmatmul.mubr.f32.gmra.mrb[0].mxu0 %v363
          %v434 = vpop.f32.mrb[0].mxu0
          %v435 = vadd.f32 0.0, %v434
          %v436 = vpop.f32.mrb[0].mxu0
          %437 = vmatprep.mubr.f32.mxu0 0.0
          %438 = vmatmul.mubr.f32.gmra.mrb[0].mxu0 %v366
          %v439 = vpop.f32.mrb[0].mxu0
          %v440 = vadd.f32 0.0, %v439
          %v441 = vpop.f32.mrb[0].mxu0
          %442 = vdwg.mxu0
          %vm443 = vcmask 523264
          %444 = vst.msk [vmem:[#allocation2] sm:$0xff] %vm443, %v435
          %445 = vst.msk [vmem:[#allocation2 + $0x8] sm:$0xff] %vm443, %v440
        $region68: #{tpu_custom_call.1} parent=43 // pred_fallthru
          _
        %v446 = vld [vmem:[%s306] sm:$0xff]
        %v447 = vld [vmem:[#allocation9] sm:$0xff]
        %v448 = vld [vmem:[#allocation9 + $0x8] sm:$0xff]
        %v449 = vld [vmem:[#allocation9 + $0x10] sm:$0xff]
        %v450 = vld [vmem:[#allocation9 + $0x18] sm:$0xff]
        %vm451 = vcmask 261120
        %v453 = vsel %vm451, %v446, 0
        %455 = vmatprep.subr.mxu0 0.0
        %456 = vmatpush1.msra.mxu0 %v447
        %457 = vmatprep.subr.mxu0 0.0
        %458 = vmatpush1.msra.mxu0 %v448
        %459 = vmatprep.subr.mxu0 0.0
        %460 = vmatpush1.msra.mxu0 %v449
        %461 = vmatprep.subr.mxu0 0.0
        %462 = vmatpush1.msra.mxu0 %v450
        %463 = vmatprep.subr.mxu0 0.0
        %464 = vmatpush1.msra.mxu0 0.0
        %465 = vmatprep.subr.mxu0 0.0
        %466 = vmatpush1.msra.mxu0 0.0
        %467 = vmatprep.subr.mxu0 0.0
        %468 = vmatpush1.msra.mxu0 0.0
        %469 = vmatprep.subr.mxu0 0.0
        %470 = vmatpush1.msra.mxu0 0.0
        %471 = vmatprep.subr.mxu0 0.0
        %472 = vmatpush1.msra.mxu0 0.0
        %473 = vmatprep.subr.mxu0 0.0
        %474 = vmatpush1.msra.mxu0 0.0
        %475 = vmatprep.subr.mxu0 0.0
        %476 = vmatpush1.msra.mxu0 0.0
        %477 = vmatprep.subr.mxu0 0.0
        %478 = vmatpush1.msra.mxu0 0.0
        %479 = vmatprep.subr.mxu0 0.0
        %480 = vmatpush1.msra.mxu0 0.0
        %481 = vmatprep.subr.mxu0 0.0
        %482 = vmatpush1.msra.mxu0 0.0
        %483 = vmatprep.subr.mxu0 0.0
        %484 = vmatpush1.msra.mxu0 0.0
        %485 = vmatprep.subr.mxu0 0.0
        %486 = vmatpush1.msra.mxu0 0.0
        %487 = vmatprep.subr.mxu0 0.0
        %488 = vmatpush1.msra.mxu0 0.0
        %489 = vmatprep.subr.mxu0 0.0
        %490 = vmatpush1.msra.mxu0 0.0
        %491 = vmatprep.subr.mxu0 0.0
        %492 = vmatpush1.msra.mxu0 0.0
        %493 = vmatprep.subr.mxu0 0.0
        %494 = vmatpush1.msra.mxu0 0.0
        %495 = vmatprep.subr.mxu0 0.0
        %496 = vmatpush1.msra.mxu0 0.0
        %497 = vmatprep.subr.mxu0 0.0
        %498 = vmatpush1.msra.mxu0 0.0
        %499 = vmatprep.subr.mxu0 0.0
        %500 = vmatpush1.msra.mxu0 0.0
        %501 = vmatprep.subr.mxu0 0.0
        %502 = vmatpush1.msra.mxu0 0.0
        %503 = vmatprep.subr.mxu0 0.0
        %504 = vmatpush1.msra.mxu0 0.0
        %505 = vmatprep.subr.mxu0 0.0
        %506 = vmatpush1.msra.mxu0 0.0
        %507 = vmatprep.subr.mxu0 0.0
        %508 = vmatpush1.msra.mxu0 0.0
        %509 = vmatprep.subr.mxu0 0.0
        %510 = vmatpush1.msra.mxu0 0.0
        %511 = vmatprep.subr.mxu0 0.0
        %512 = vmatpush1.msra.mxu0 0.0
        %513 = vmatprep.subr.mxu0 0.0
        %514 = vmatpush1.msra.mxu0 0.0
        %515 = vmatprep.subr.mxu0 0.0
        %516 = vmatpush1.msra.mxu0 0.0
        %517 = vmatprep.subr.mxu0 0.0
        %518 = vmatpush1.msra.mxu0 0.0
        %519 = vmatprep.mubr.f32.mxu0 0.0
        %520 = vmatmul.mubr.f32.gmra.mrb[0].mxu0 %v453
        %v521 = vpop.f32.mrb[0].mxu0
        %v522 = vadd.f32 0.0, %v521
        %v523 = vpop.f32.mrb[0].mxu0
        %524 = vdwg.mxu0
        %v525 = vld [vmem:[#allocation2] sm:$0xff]
        %v526 = vld [vmem:[#allocation2 + $0x8] sm:$0xff]
        %vm527 = vcmask 130048
        %v529 = vsel %vm527, %v522, 0
        %v532 = vsel %vm527, %v525, 0
        %v535 = vsel %vm527, %v526, 0
        %537 = vmatprep.subr.mxu0 0.0
        %538 = vmatpush1.xpose.msra.mxu0 %v532
        %539 = vmatprep.subr.mxu0 0.0
        %540 = vmatpush1.xpose.msra.mxu0 %v535
        %541 = vmatprep.subr.mxu0 0.0
        %542 = vmatpush1.xpose.msra.mxu0 0.0
        %543 = vmatprep.subr.mxu0 0.0
        %544 = vmatpush1.xpose.msra.mxu0 0.0
        %545 = vmatprep.subr.mxu0 0.0
        %546 = vmatpush1.xpose.msra.mxu0 0.0
        %547 = vmatprep.subr.mxu0 0.0
        %548 = vmatpush1.xpose.msra.mxu0 0.0
        %549 = vmatprep.subr.mxu0 0.0
        %550 = vmatpush1.xpose.msra.mxu0 0.0
        %551 = vmatprep.subr.mxu0 0.0
        %552 = vmatpush1.xpose.msra.mxu0 0.0
        %553 = vmatprep.subr.mxu0 0.0
        %554 = vmatpush1.xpose.msra.mxu0 0.0
        %555 = vmatprep.subr.mxu0 0.0
        %556 = vmatpush1.xpose.msra.mxu0 0.0
        %557 = vmatprep.subr.mxu0 0.0
        %558 = vmatpush1.xpose.msra.mxu0 0.0
        %559 = vmatprep.subr.mxu0 0.0
        %560 = vmatpush1.xpose.msra.mxu0 0.0
        %561 = vmatprep.subr.mxu0 0.0
        %562 = vmatpush1.xpose.msra.mxu0 0.0
        %563 = vmatprep.subr.mxu0 0.0
        %564 = vmatpush1.xpose.msra.mxu0 0.0
        %565 = vmatprep.subr.mxu0 0.0
        %566 = vmatpush1.xpose.msra.mxu0 0.0
        %567 = vmatprep.subr.mxu0 0.0
        %568 = vmatpush1.xpose.msra.mxu0 0.0
        %569 = vmatprep.subr.mxu0 0.0
        %570 = vmatpush1.xpose.msra.mxu0 0.0
        %571 = vmatprep.subr.mxu0 0.0
        %572 = vmatpush1.xpose.msra.mxu0 0.0
        %573 = vmatprep.subr.mxu0 0.0
        %574 = vmatpush1.xpose.msra.mxu0 0.0
        %575 = vmatprep.subr.mxu0 0.0
        %576 = vmatpush1.xpose.msra.mxu0 0.0
        %577 = vmatprep.subr.mxu0 0.0
        %578 = vmatpush1.xpose.msra.mxu0 0.0
        %579 = vmatprep.subr.mxu0 0.0
        %580 = vmatpush1.xpose.msra.mxu0 0.0
        %581 = vmatprep.subr.mxu0 0.0
        %582 = vmatpush1.xpose.msra.mxu0 0.0
        %583 = vmatprep.subr.mxu0 0.0
        %584 = vmatpush1.xpose.msra.mxu0 0.0
        %585 = vmatprep.subr.mxu0 0.0
        %586 = vmatpush1.xpose.msra.mxu0 0.0
        %587 = vmatprep.subr.mxu0 0.0
        %588 = vmatpush1.xpose.msra.mxu0 0.0
        %589 = vmatprep.subr.mxu0 0.0
        %590 = vmatpush1.xpose.msra.mxu0 0.0
        %591 = vmatprep.subr.mxu0 0.0
        %592 = vmatpush1.xpose.msra.mxu0 0.0
        %593 = vmatprep.subr.mxu0 0.0
        %594 = vmatpush1.xpose.msra.mxu0 0.0
        %595 = vmatprep.subr.mxu0 0.0
        %596 = vmatpush1.xpose.msra.mxu0 0.0
        %597 = vmatprep.subr.mxu0 0.0
        %598 = vmatpush1.xpose.msra.mxu0 0.0
        %599 = vmatprep.subr.mxu0 0.0
        %600 = vmatpush1.xpose.msra.mxu0 0.0
        %601 = vmatprep.mubr.f32.mxu0 0.0
        %602 = vmatmul.mubr.f32.gmra.mrb[0].mxu0 %v529
        %v603 = vpop.f32.mrb[0].mxu0
        %v604 = vadd.f32 0.0, %v603
        %v605 = vpop.f32.mrb[0].mxu0
        %606 = vdwg.mxu0
        %v607 = vsel %vm527, %v604, -inf
        %608 = vmax.xlane.f32.xlu0 %v607
        %v609 = vpop.xlane.xlu0 %608
        %v610 = vsub.f32 %v604, %v609
        %v611 = vmul.f32 %v610, 1.442695
        %v612 = vpow.pop %v611
        %v613 = vsel %vm527, %v612, 0.0
        %614 = vadd.xlane.f32.xlu0 %v613
        %v615 = vpop.xlane.xlu0 %614
        %v616 = vrcp.pop %v615
        %v617 = vmul.f32 %v615, %v616
        %v618 = vsub.f32 2.0, %v617
        %v619 = vmul.f32 %v616, %v618
        %v620 = vmul.f32 %v612, %v619
        %621 = vrot.lane.b32.xlu0 %v525, 96
        %v622 = vpop.permute.xlu0 %621
        %623 = vrot.lane.b32.xlu0 %v526, 96
        %v624 = vpop.permute.xlu0 %623
        %v628 = vsel %vm527, %v620, 0
        %630 = vmatprep.subr.mxu0 0.0
        %631 = vmatpush1.msra.mxu0 %v622
        %632 = vmatprep.subr.mxu0 0.0
        %633 = vmatpush1.msra.mxu0 %v624
        %634 = vmatprep.subr.mxu0 0.0
        %635 = vmatpush1.msra.mxu0 0.0
        %636 = vmatprep.subr.mxu0 0.0
        %637 = vmatpush1.msra.mxu0 0.0
        %638 = vmatprep.subr.mxu0 0.0
        %639 = vmatpush1.msra.mxu0 0.0
        %640 = vmatprep.subr.mxu0 0.0
        %641 = vmatpush1.msra.mxu0 0.0
        %642 = vmatprep.subr.mxu0 0.0
        %643 = vmatpush1.msra.mxu0 0.0
        %644 = vmatprep.subr.mxu0 0.0
        %645 = vmatpush1.msra.mxu0 0.0
        %646 = vmatprep.subr.mxu0 0.0
        %647 = vmatpush1.msra.mxu0 0.0
        %648 = vmatprep.subr.mxu0 0.0
        %649 = vmatpush1.msra.mxu0 0.0
        %650 = vmatprep.subr.mxu0 0.0
        %651 = vmatpush1.msra.mxu0 0.0
        %652 = vmatprep.subr.mxu0 0.0
        %653 = vmatpush1.msra.mxu0 0.0
        %654 = vmatprep.subr.mxu0 0.0
        %655 = vmatpush1.msra.mxu0 0.0
        %656 = vmatprep.subr.mxu0 0.0
        %657 = vmatpush1.msra.mxu0 0.0
        %658 = vmatprep.subr.mxu0 0.0
        %659 = vmatpush1.msra.mxu0 0.0
        %660 = vmatprep.subr.mxu0 0.0
        %661 = vmatpush1.msra.mxu0 0.0
        %662 = vmatprep.subr.mxu0 0.0
        %663 = vmatpush1.msra.mxu0 0.0
        %664 = vmatprep.subr.mxu0 0.0
        %665 = vmatpush1.msra.mxu0 0.0
        %666 = vmatprep.subr.mxu0 0.0
        %667 = vmatpush1.msra.mxu0 0.0
        %668 = vmatprep.subr.mxu0 0.0
        %669 = vmatpush1.msra.mxu0 0.0
        %670 = vmatprep.subr.mxu0 0.0
        %671 = vmatpush1.msra.mxu0 0.0
        %672 = vmatprep.subr.mxu0 0.0
        %673 = vmatpush1.msra.mxu0 0.0
        %674 = vmatprep.subr.mxu0 0.0
        %675 = vmatpush1.msra.mxu0 0.0
        %676 = vmatprep.subr.mxu0 0.0
        %677 = vmatpush1.msra.mxu0 0.0
        %678 = vmatprep.subr.mxu0 0.0
        %679 = vmatpush1.msra.mxu0 0.0
        %680 = vmatprep.subr.mxu0 0.0
        %681 = vmatpush1.msra.mxu0 0.0
        %682 = vmatprep.subr.mxu0 0.0
        %683 = vmatpush1.msra.mxu0 0.0
        %684 = vmatprep.subr.mxu0 0.0
        %685 = vmatpush1.msra.mxu0 0.0
        %686 = vmatprep.subr.mxu0 0.0
        %687 = vmatpush1.msra.mxu0 0.0
        %688 = vmatprep.subr.mxu0 0.0
        %689 = vmatpush1.msra.mxu0 0.0
        %690 = vmatprep.subr.mxu0 0.0
        %691 = vmatpush1.msra.mxu0 0.0
        %692 = vmatprep.subr.mxu0 0.0
        %693 = vmatpush1.msra.mxu0 0.0
        %694 = vmatprep.mubr.f32.mxu0 0.0
        %695 = vmatmul.mubr.f32.gmra.mrb[0].mxu0 %v628
        %v696 = vpop.f32.mrb[0].mxu0
        %v697 = vadd.f32 0.0, %v696
        %v698 = vpop.f32.mrb[0].mxu0
        %699 = vdwg.mxu0
        %700 = vst.msk [vmem:[#allocation3] sm:$0xff] %vm527, %v697
        %v701 = vld [vmem:[#allocation2] sm:$0xff]
        %v702 = vld [vmem:[#allocation2 + $0x8] sm:$0xff]
        %703 = vrot.lane.b32.xlu0 %v522, 112
        %v704 = vpop.permute.xlu0 %703
        %707 = vrot.lane.b32.xlu0 %v701, 112
        %v708 = vpop.permute.xlu0 %707
        %709 = vrot.lane.b32.xlu0 %v702, 112
        %v710 = vpop.permute.xlu0 %709
        %v711 = vsel %vm527, %v704, 0
        %v713 = vsel %vm527, %v708, 0
        %v715 = vsel %vm527, %v710, 0
        %717 = vmatprep.subr.mxu0 0.0
        %718 = vmatpush1.xpose.msra.mxu0 %v713
        %719 = vmatprep.subr.mxu0 0.0
        %720 = vmatpush1.xpose.msra.mxu0 %v715
        %721 = vmatprep.subr.mxu0 0.0
        %722 = vmatpush1.xpose.msra.mxu0 0.0
        %723 = vmatprep.subr.mxu0 0.0
        %724 = vmatpush1.xpose.msra.mxu0 0.0
        %725 = vmatprep.subr.mxu0 0.0
        %726 = vmatpush1.xpose.msra.mxu0 0.0
        %727 = vmatprep.subr.mxu0 0.0
        %728 = vmatpush1.xpose.msra.mxu0 0.0
        %729 = vmatprep.subr.mxu0 0.0
        %730 = vmatpush1.xpose.msra.mxu0 0.0
        %731 = vmatprep.subr.mxu0 0.0
        %732 = vmatpush1.xpose.msra.mxu0 0.0
        %733 = vmatprep.subr.mxu0 0.0
        %734 = vmatpush1.xpose.msra.mxu0 0.0
        %735 = vmatprep.subr.mxu0 0.0
        %736 = vmatpush1.xpose.msra.mxu0 0.0
        %737 = vmatprep.subr.mxu0 0.0
        %738 = vmatpush1.xpose.msra.mxu0 0.0
        %739 = vmatprep.subr.mxu0 0.0
        %740 = vmatpush1.xpose.msra.mxu0 0.0
        %741 = vmatprep.subr.mxu0 0.0
        %742 = vmatpush1.xpose.msra.mxu0 0.0
        %743 = vmatprep.subr.mxu0 0.0
        %744 = vmatpush1.xpose.msra.mxu0 0.0
        %745 = vmatprep.subr.mxu0 0.0
        %746 = vmatpush1.xpose.msra.mxu0 0.0
        %747 = vmatprep.subr.mxu0 0.0
        %748 = vmatpush1.xpose.msra.mxu0 0.0
        %749 = vmatprep.subr.mxu0 0.0
        %750 = vmatpush1.xpose.msra.mxu0 0.0
        %751 = vmatprep.subr.mxu0 0.0
        %752 = vmatpush1.xpose.msra.mxu0 0.0
        %753 = vmatprep.subr.mxu0 0.0
        %754 = vmatpush1.xpose.msra.mxu0 0.0
        %755 = vmatprep.subr.mxu0 0.0
        %756 = vmatpush1.xpose.msra.mxu0 0.0
        %757 = vmatprep.subr.mxu0 0.0
        %758 = vmatpush1.xpose.msra.mxu0 0.0
        %759 = vmatprep.subr.mxu0 0.0
        %760 = vmatpush1.xpose.msra.mxu0 0.0
        %761 = vmatprep.subr.mxu0 0.0
        %762 = vmatpush1.xpose.msra.mxu0 0.0
        %763 = vmatprep.subr.mxu0 0.0
        %764 = vmatpush1.xpose.msra.mxu0 0.0
        %765 = vmatprep.subr.mxu0 0.0
        %766 = vmatpush1.xpose.msra.mxu0 0.0
        %767 = vmatprep.subr.mxu0 0.0
        %768 = vmatpush1.xpose.msra.mxu0 0.0
        %769 = vmatprep.subr.mxu0 0.0
        %770 = vmatpush1.xpose.msra.mxu0 0.0
        %771 = vmatprep.subr.mxu0 0.0
        %772 = vmatpush1.xpose.msra.mxu0 0.0
        %773 = vmatprep.subr.mxu0 0.0
        %774 = vmatpush1.xpose.msra.mxu0 0.0
        %775 = vmatprep.subr.mxu0 0.0
        %776 = vmatpush1.xpose.msra.mxu0 0.0
        %777 = vmatprep.subr.mxu0 0.0
        %778 = vmatpush1.xpose.msra.mxu0 0.0
        %779 = vmatprep.subr.mxu0 0.0
        %780 = vmatpush1.xpose.msra.mxu0 0.0
        %781 = vmatprep.mubr.f32.mxu0 0.0
        %782 = vmatmul.mubr.f32.gmra.mrb[0].mxu0 %v711
        %v783 = vpop.f32.mrb[0].mxu0
        %v784 = vadd.f32 0.0, %v783
        %v785 = vpop.f32.mrb[0].mxu0
        %786 = vdwg.mxu0
        %v787 = vsel %vm527, %v784, -inf
        %788 = vmax.xlane.f32.xlu0 %v787
        %v789 = vpop.xlane.xlu0 %788
        %v790 = vsub.f32 %v784, %v789
        %v791 = vmul.f32 %v790, 1.442695
        %v792 = vpow.pop %v791
        %v793 = vsel %vm527, %v792, 0.0
        %794 = vadd.xlane.f32.xlu0 %v793
        %v795 = vpop.xlane.xlu0 %794
        %v796 = vrcp.pop %v795
        %v797 = vmul.f32 %v795, %v796
        %v798 = vsub.f32 2.0, %v797
        %v799 = vmul.f32 %v796, %v798
        %v800 = vmul.f32 %v792, %v799
        %801 = vrot.lane.b32.xlu0 %v701, 80
        %v802 = vpop.permute.xlu0 %801
        %803 = vrot.lane.b32.xlu0 %v702, 80
        %v804 = vpop.permute.xlu0 %803
        %v808 = vsel %vm527, %v800, 0
        %810 = vmatprep.subr.mxu0 0.0
        %811 = vmatpush1.msra.mxu0 %v802
        %812 = vmatprep.subr.mxu0 0.0
        %813 = vmatpush1.msra.mxu0 %v804
        %814 = vmatprep.subr.mxu0 0.0
        %815 = vmatpush1.msra.mxu0 0.0
        %816 = vmatprep.subr.mxu0 0.0
        %817 = vmatpush1.msra.mxu0 0.0
        %818 = vmatprep.subr.mxu0 0.0
        %819 = vmatpush1.msra.mxu0 0.0
        %820 = vmatprep.subr.mxu0 0.0
        %821 = vmatpush1.msra.mxu0 0.0
        %822 = vmatprep.subr.mxu0 0.0
        %823 = vmatpush1.msra.mxu0 0.0
        %824 = vmatprep.subr.mxu0 0.0
        %825 = vmatpush1.msra.mxu0 0.0
        %826 = vmatprep.subr.mxu0 0.0
        %827 = vmatpush1.msra.mxu0 0.0
        %828 = vmatprep.subr.mxu0 0.0
        %829 = vmatpush1.msra.mxu0 0.0
        %830 = vmatprep.subr.mxu0 0.0
        %831 = vmatpush1.msra.mxu0 0.0
        %832 = vmatprep.subr.mxu0 0.0
        %833 = vmatpush1.msra.mxu0 0.0
        %834 = vmatprep.subr.mxu0 0.0
        %835 = vmatpush1.msra.mxu0 0.0
        %836 = vmatprep.subr.mxu0 0.0
        %837 = vmatpush1.msra.mxu0 0.0
        %838 = vmatprep.subr.mxu0 0.0
        %839 = vmatpush1.msra.mxu0 0.0
        %840 = vmatprep.subr.mxu0 0.0
        %841 = vmatpush1.msra.mxu0 0.0
        %842 = vmatprep.subr.mxu0 0.0
        %843 = vmatpush1.msra.mxu0 0.0
        %844 = vmatprep.subr.mxu0 0.0
        %845 = vmatpush1.msra.mxu0 0.0
        %846 = vmatprep.subr.mxu0 0.0
        %847 = vmatpush1.msra.mxu0 0.0
        %848 = vmatprep.subr.mxu0 0.0
        %849 = vmatpush1.msra.mxu0 0.0
        %850 = vmatprep.subr.mxu0 0.0
        %851 = vmatpush1.msra.mxu0 0.0
        %852 = vmatprep.subr.mxu0 0.0
        %853 = vmatpush1.msra.mxu0 0.0
        %854 = vmatprep.subr.mxu0 0.0
        %855 = vmatpush1.msra.mxu0 0.0
        %856 = vmatprep.subr.mxu0 0.0
        %857 = vmatpush1.msra.mxu0 0.0
        %858 = vmatprep.subr.mxu0 0.0
        %859 = vmatpush1.msra.mxu0 0.0
        %860 = vmatprep.subr.mxu0 0.0
        %861 = vmatpush1.msra.mxu0 0.0
        %862 = vmatprep.subr.mxu0 0.0
        %863 = vmatpush1.msra.mxu0 0.0
        %864 = vmatprep.subr.mxu0 0.0
        %865 = vmatpush1.msra.mxu0 0.0
        %866 = vmatprep.subr.mxu0 0.0
        %867 = vmatpush1.msra.mxu0 0.0
        %868 = vmatprep.subr.mxu0 0.0
        %869 = vmatpush1.msra.mxu0 0.0
        %870 = vmatprep.subr.mxu0 0.0
        %871 = vmatpush1.msra.mxu0 0.0
        %872 = vmatprep.subr.mxu0 0.0
        %873 = vmatpush1.msra.mxu0 0.0
        %874 = vmatprep.mubr.f32.mxu0 0.0
        %875 = vmatmul.mubr.f32.gmra.mrb[0].mxu0 %v808
        %v876 = vpop.f32.mrb[0].mxu0
        %v877 = vadd.f32 0.0, %v876
        %v878 = vpop.f32.mrb[0].mxu0
        %879 = vdwg.mxu0
        %881 = vrot.lane.b32.xlu0 %v877, 16
        %v882 = vpop.permute.xlu0 %881
        %vm884 = vcmask 261248
        %885 = vst.msk [vmem:[#allocation3] sm:$0xff] %vm884, %v882
        %v886 = vld [vmem:[#allocation3] sm:$0xff]
        %v887 = vld [vmem:[#allocation12] sm:$0xff]
        %v888 = vld [vmem:[#allocation12 + $0x8] sm:$0xff]
        %v889 = vld [vmem:[#allocation12 + $0x10] sm:$0xff]
        %v890 = vld [vmem:[#allocation12 + $0x18] sm:$0xff]
        %v891 = vld [vmem:[%s5] sm:$0x1]
        %v893 = vlaneseq
        %v894 = vshrl.u32 %v893, 7
        %v895 = vsub.s32 0, %v894
        %v896 = vrot.slane %v891, %v895
        %v899 = vsel %vm451, %v886, 0
        %901 = vmatprep.subr.mxu0 0.0
        %902 = vmatpush1.msra.mxu0 %v887
        %903 = vmatprep.subr.mxu0 0.0
        %904 = vmatpush1.msra.mxu0 %v888
        %905 = vmatprep.subr.mxu0 0.0
        %906 = vmatpush1.msra.mxu0 %v889
        %907 = vmatprep.subr.mxu0 0.0
        %908 = vmatpush1.msra.mxu0 %v890
        %909 = vmatprep.subr.mxu0 0.0
        %910 = vmatpush1.msra.mxu0 0.0
        %911 = vmatprep.subr.mxu0 0.0
        %912 = vmatpush1.msra.mxu0 0.0
        %913 = vmatprep.subr.mxu0 0.0
        %914 = vmatpush1.msra.mxu0 0.0
        %915 = vmatprep.subr.mxu0 0.0
        %916 = vmatpush1.msra.mxu0 0.0
        %917 = vmatprep.subr.mxu0 0.0
        %918 = vmatpush1.msra.mxu0 0.0
        %919 = vmatprep.subr.mxu0 0.0
        %920 = vmatpush1.msra.mxu0 0.0
        %921 = vmatprep.subr.mxu0 0.0
        %922 = vmatpush1.msra.mxu0 0.0
        %923 = vmatprep.subr.mxu0 0.0
        %924 = vmatpush1.msra.mxu0 0.0
        %925 = vmatprep.subr.mxu0 0.0
        %926 = vmatpush1.msra.mxu0 0.0
        %927 = vmatprep.subr.mxu0 0.0
        %928 = vmatpush1.msra.mxu0 0.0
        %929 = vmatprep.subr.mxu0 0.0
        %930 = vmatpush1.msra.mxu0 0.0
        %931 = vmatprep.subr.mxu0 0.0
        %932 = vmatpush1.msra.mxu0 0.0
        %933 = vmatprep.subr.mxu0 0.0
        %934 = vmatpush1.msra.mxu0 0.0
        %935 = vmatprep.subr.mxu0 0.0
        %936 = vmatpush1.msra.mxu0 0.0
        %937 = vmatprep.subr.mxu0 0.0
        %938 = vmatpush1.msra.mxu0 0.0
        %939 = vmatprep.subr.mxu0 0.0
        %940 = vmatpush1.msra.mxu0 0.0
        %941 = vmatprep.subr.mxu0 0.0
        %942 = vmatpush1.msra.mxu0 0.0
        %943 = vmatprep.subr.mxu0 0.0
        %944 = vmatpush1.msra.mxu0 0.0
        %945 = vmatprep.subr.mxu0 0.0
        %946 = vmatpush1.msra.mxu0 0.0
        %947 = vmatprep.subr.mxu0 0.0
        %948 = vmatpush1.msra.mxu0 0.0
        %949 = vmatprep.subr.mxu0 0.0
        %950 = vmatpush1.msra.mxu0 0.0
        %951 = vmatprep.subr.mxu0 0.0
        %952 = vmatpush1.msra.mxu0 0.0
        %953 = vmatprep.subr.mxu0 0.0
        %954 = vmatpush1.msra.mxu0 0.0
        %955 = vmatprep.subr.mxu0 0.0
        %956 = vmatpush1.msra.mxu0 0.0
        %957 = vmatprep.subr.mxu0 0.0
        %958 = vmatpush1.msra.mxu0 0.0
        %959 = vmatprep.subr.mxu0 0.0
        %960 = vmatpush1.msra.mxu0 0.0
        %961 = vmatprep.subr.mxu0 0.0
        %962 = vmatpush1.msra.mxu0 0.0
        %963 = vmatprep.subr.mxu0 0.0
        %964 = vmatpush1.msra.mxu0 0.0
        %965 = vmatprep.mubr.f32.mxu0 0.0
        %966 = vmatmul.mubr.f32.gmra.mrb[0].mxu0 %v899
        %v967 = vpop.f32.mrb[0].mxu0
        %v968 = vadd.f32 %v896, %v967
        %v969 = vpop.f32.mrb[0].mxu0
        %970 = vdwg.mxu0
        %971 = vst.msk [vmem:[%s350] sm:$0xff] %vm451, %v968
        %s972 = sand.u32 %s185, 1
        %s973 = scalar_lea.sflag [#allocation6], %s972
        %s974 = sand.u32 %s185, 1
        %s975 = smul.addr %s974, 8
        %s976 = scalar_lea.vmem [#allocation13], %s975
        // Predicated region
        $region69: #{tpu_custom_call.1} parent=43 // pred_check
          %p977 = pneg %p195
        $region70: #{tpu_custom_call.1} parent=43 // pred_check_branch
          %979 = sbr.rel (%p977) target = $region72
        $region71: #{tpu_custom_call.1} parent=43 // pred_region
          %s981 = ssub.s32 128, 128
          %982 = vsyncadd %s973, %s981
          %s983 = smul.addr %s29, 3
          %s984 = sadd.s32 %s30, %s983
          %s985 = smul.addr %s984, 128
          %s986 = scalar_lea.hbm %s6, %s985
          %s988 = sshll.u32 %s976, 4
          %s989 = int_to_ptr.vmem [resolvable:$true] %s988
          %991 = dma.vmem_to_hbm [thread:$0]  %s989, 128, %s986, %s973
        $region72: #{tpu_custom_call.1} parent=43 // pred_fallthru
          _
      $region44: #{tpu_custom_call.1} parent=5 // pred_fallthru
        _
      %p992 = scmp.le.s32.totalorder 2, %s20
      // Predicated region
      $region73: #{tpu_custom_call.1} parent=5 // pred_check
        %p993 = pneg %p992
      $region74: #{tpu_custom_call.1} parent=5 // pred_check_branch
        %995 = sbr.rel (%p993) target = $region76
      $region75: #{tpu_custom_call.1} parent=5 // pred_region
        %s996 = ssub.s32 %s20, 2
        // Predicated region
        $region77: #{tpu_custom_call.1} parent=75 // pred_check
          %p997 = pneg %p201
        $region78: #{tpu_custom_call.1} parent=75 // pred_check_branch
          %999 = sbr.rel (%p997) target = $region80
        $region79: #{tpu_custom_call.1} parent=75 // pred_region
          %s1000 = sand.u32 %s186, 1
          %s1001 = scalar_lea.sflag [#allocation6], %s1000
          %s1002 = sand.u32 %s186, 1
          %s1003 = smul.addr %s1002, 8
          %s1004 = scalar_lea.vmem [#allocation13], %s1003
          %1005 = dma.done %s1001, 128
        $region80: #{tpu_custom_call.1} parent=75 // pred_fallthru
          _
      $region76: #{tpu_custom_call.1} parent=5 // pred_fallthru
        _
    $region6: #{tpu_custom_call.1} parent=1 // loop_footer
      %s24 = sadd.s32 1, %s20
    $region7: #{tpu_custom_call.1} parent=1 // loop_footer_branch
      %19 = sbr.rel target = $region3
    $region8: #{tpu_custom_call.1} parent=1 // loop_exit
      _
    %1006 = vsyncpa [#allocation5], 1
    %s1007 = scalar_lea.sflag [#allocation5], 1
    %1008 = vsyncpa %s1007, 1
    %1009 = vsyncpa [#allocation8], 1
    %1010 = vsyncpa [#allocation11], 1
    %1011 = vsyncpa [#allocation6], 1
    %s1012 = scalar_lea.sflag [#allocation6], 1
    %1013 = vsyncpa %s1012, 1

// kernel: tpu_custom_call.1
$region0: #{tpu_custom_call.1}
  #allocation0 [shape = 'u32[]', space=smem, size = 0x4, offset = 0x4, fixed_abs, tag = 'smem constant byte address 0x4 - core index']
  #allocation1 [shape = 'u32[144,128]{1,0:T(1,128)}', space=vmem, size = 0x12000, scoped, tag = 'internal scratch']
  #allocation2 [shape = 'f32[16,64]{1,0:T(8,128)}', space=vmem, size = 0x2000, scoped, tag = 'scratch operand']
  #allocation3 [shape = 'f32[8,32]{1,0:T(8,128)}', space=vmem, size = 0x1000, scoped, tag = 'scratch operand']
  %s0 = inlined_call_operand.hbm [shape: f32[2,24,32], index: 0, kind: input, shape index: {}]
  %s1 = inlined_call_operand.hbm [shape: f32[2,16,32], index: 1, kind: input, shape index: {}]
  %s2 = inlined_call_operand.hbm [shape: f32[32,32], index: 2, kind: input, shape index: {}]
  %s3 = inlined_call_operand.hbm [shape: f32[32,64], index: 3, kind: input, shape index: {}]
  %s4 = inlined_call_operand.hbm [shape: f32[32,32], index: 4, kind: input, shape index: {}]
  %s5 = inlined_call_operand.vmem [shape: f32[1,32], index: 5, kind: input, shape index: {}]
  %s6 = inlined_call_operand.hbm [shape: f32[2,24,32], index: 6, kind: output, shape index: {}]
  %s7 = sld [smem:[#allocation0]]
  $region81: #{tpu_custom_call.1} parent=0
    _
  %s9 = ssub.s32 1, %s7
  %s10 = scalar_select 0, %s9, %s7
  $region1: #{tpu_custom_call.1} parent=0
    #allocation4 [shape = 'u8[8192]{0}', space=vmem, size = 0x2000, scoped, tag = 'input window, operand 0']
    #allocation5 [shape = 's32[2]{0}', space=sflag, size = 0x8, scoped, tag = 'scoped memory for tpu_custom_call.1']
    #allocation6 [shape = 's32[2]{0}', space=sflag, size = 0x8, scoped, tag = 'scoped memory for tpu_custom_call.1']
    #allocation7 [shape = 'u8[16384]{0}', space=vmem, size = 0x4000, scoped, tag = 'input window, operand 1']
    #allocation8 [shape = 's32[2]{0}', space=sflag, size = 0x8, scoped, tag = 'scoped memory for tpu_custom_call.1']
    #allocation9 [shape = 'u8[16384]{0}', space=vmem, size = 0x4000, scoped, tag = 'input window, operand 2, single buffered']
    #allocation10 [shape = 'u8[16384]{0}', space=vmem, size = 0x4000, scoped, tag = 'input window, operand 3, single buffered']
    #allocation11 [shape = 's32[1]{0}', space=sflag, size = 0x4, scoped, tag = 'scoped memory for tpu_custom_call.1']
    #allocation12 [shape = 'u8[16384]{0}', space=vmem, size = 0x4000, scoped, tag = 'input window, operand 4, single buffered']
    #allocation13 [shape = 'u8[8192]{0}', space=vmem, size = 0x2000, scoped, tag = 'output window, operand 0']
    %11 = vsyncpa [#allocation5], 0
    %s12 = scalar_lea.sflag [#allocation5], 1
    %13 = vsyncpa %s12, 0
    %14 = vsyncpa [#allocation8], 0
    %s15 = scalar_lea.sflag [#allocation8], 1
    %16 = vsyncpa %s15, 0
    %17 = vsyncpa [#allocation11], 0
    %18 = vsyncpa [#allocation6], 0
    %s19 = scalar_lea.sflag [#allocation6], 1
    %20 = vsyncpa %s19, 0
    loop: start=0, step=1, limit=8
    $region2: #{tpu_custom_call.1} parent=1 // loop_pre_header
      _
    $region3: #{tpu_custom_call.1} parent=1 // loop_header
      %s22 = sphi 0, %s26
      %p23 = scmp.ge.s32.totalorder %s22, 8
      %s29 = sphi 0, %s41
      %s30 = sphi 0, %s37
      %s31 = sphi 0, %s29
      %s32 = sphi 0, %s30
      %s33 = sphi 0, %s31
      %s34 = sphi 0, %s32
      %s46 = sphi 0, %s48
      %s49 = sphi 0, %s46
      %s50 = sphi 0, %s49
      %s66 = sphi 0, %s50
      %s72 = sphi 0, %s74
      %s75 = sphi 0, %s72
      %s76 = sphi 0, %s75
      %s92 = sphi 0, %s76
      %s96 = sphi 0, %s96
      %s98 = sphi 0, %s96
      %s99 = sphi 0, %s98
      %s113 = sphi 0, %s99
      %s117 = sphi 0, %s117
      %s119 = sphi 0, %s117
      %s120 = sphi 0, %s119
      %s134 = sphi 0, %s120
      %s138 = sphi 0, %s138
      %s140 = sphi 0, %s138
      %s141 = sphi 0, %s140
      %s155 = sphi 0, %s141
      %s159 = sphi 0, %s159
      %s161 = sphi 0, %s159
      %s162 = sphi 0, %s161
      %s176 = sphi 0, %s162
      %s184 = sphi 0, %s186
      %s187 = sphi 0, %s184
      %s188 = sphi 0, %s187
      %s204 = sphi 0, %s188
    $region4: #{tpu_custom_call.1} parent=1 // loop_header_branch
      %25 = sbr.rel (%p23) target = $region8
    $region5: #{tpu_custom_call.1} parent=1 // loop_body
      %s27 = ssub.s32 %s22, 1
      %s28 = ssub.s32 %s22, 2
      %s35 = sadd.s32 1, %s30
      %p36 = scmp.ge.s32.totalorder %s35, 3
      %s37 = scalar_select %p36, 0, %s35
      %s38 = sadd.s32 1, %s29
      %s39 = scalar_select %p36, %s38, %s29
      %p40 = scmp.ge.s32.totalorder %s39, 2
      %s41 = scalar_select %p40, 0, %s39
      %s42 = ssub.s32 %s29, %s41
      %s43 = ssub.s32 %s30, %s37
      %s44 = sor.u32 %s42, %s43
      %p45 = scmp.eq.s32.totalorder %s44, 0
      %s47 = sadd.s32 %s46, 1
      %s48 = scalar_select %p45, %s46, %s47
      %p51 = pneg %p45
      %p52 = scmp.eq.s32.totalorder %s22, 5
      %p53 = por %p51, %p52
      %p54 = scmp.ne.s32.totalorder %s46, %s49
      %p55 = scmp.eq.s32.totalorder %s22, 0
      %p56 = por %p54, %p55
      %p57 = scmp.ne.s32.totalorder %s46, %s49
      %p58 = scmp.eq.s32.totalorder %s27, 5
      %p59 = por %p57, %p58
      %p60 = scmp.ne.s32.totalorder %s49, %s50
      %p61 = scmp.eq.s32.totalorder %s27, 0
      %p62 = por %p60, %p61
      %p63 = scmp.ne.s32.totalorder %s49, %s50
      %p64 = scmp.eq.s32.totalorder %s28, 5
      %p65 = por %p63, %p64
      %p67 = scmp.ne.s32.totalorder %s50, %s66
      %p68 = scmp.eq.s32.totalorder %s28, 0
      %p69 = por %p67, %p68
      %s70 = ssub.s32 %s29, %s41
      %p71 = scmp.eq.s32.totalorder %s70, 0
      %s73 = sadd.s32 %s72, 1
      %s74 = scalar_select %p71, %s72, %s73
      %p77 = pneg %p71
      %p78 = scmp.eq.s32.totalorder %s22, 5
      %p79 = por %p77, %p78
      %p80 = scmp.ne.s32.totalorder %s72, %s75
      %p81 = scmp.eq.s32.totalorder %s22, 0
      %p82 = por %p80, %p81
      %p83 = scmp.ne.s32.totalorder %s72, %s75
      %p84 = scmp.eq.s32.totalorder %s27, 5
      %p85 = por %p83, %p84
      %p86 = scmp.ne.s32.totalorder %s75, %s76
      %p87 = scmp.eq.s32.totalorder %s27, 0
      %p88 = por %p86, %p87
      %p89 = scmp.ne.s32.totalorder %s75, %s76
      %p90 = scmp.eq.s32.totalorder %s28, 5
      %p91 = por %p89, %p90
      %p93 = scmp.ne.s32.totalorder %s76, %s92
      %p94 = scmp.eq.s32.totalorder %s28, 0
      %p95 = por %p93, %p94
      %s97 = sadd.s32 %s96, 1
      %p100 = scmp.eq.s32.totalorder %s22, 5
      %p101 = scmp.ne.s32.totalorder %s96, %s98
      %p102 = scmp.eq.s32.totalorder %s22, 0
      %p103 = por %p101, %p102
      %p104 = scmp.ne.s32.totalorder %s96, %s98
      %p105 = scmp.eq.s32.totalorder %s27, 5
      %p106 = por %p104, %p105
      %p107 = scmp.ne.s32.totalorder %s98, %s99
      %p108 = scmp.eq.s32.totalorder %s27, 0
      %p109 = por %p107, %p108
      %p110 = scmp.ne.s32.totalorder %s98, %s99
      %p111 = scmp.eq.s32.totalorder %s28, 5
      %p112 = por %p110, %p111
      %p114 = scmp.ne.s32.totalorder %s99, %s113
      %p115 = scmp.eq.s32.totalorder %s28, 0
      %p116 = por %p114, %p115
      %s118 = sadd.s32 %s117, 1
      %p121 = scmp.eq.s32.totalorder %s22, 5
      %p122 = scmp.ne.s32.totalorder %s117, %s119
      %p123 = scmp.eq.s32.totalorder %s22, 0
      %p124 = por %p122, %p123
      %p125 = scmp.ne.s32.totalorder %s117, %s119
      %p126 = scmp.eq.s32.totalorder %s27, 5
      %p127 = por %p125, %p126
      %p128 = scmp.ne.s32.totalorder %s119, %s120
      %p129 = scmp.eq.s32.totalorder %s27, 0
      %p130 = por %p128, %p129
      %p131 = scmp.ne.s32.totalorder %s119, %s120
      %p132 = scmp.eq.s32.totalorder %s28, 5
      %p133 = por %p131, %p132
      %p135 = scmp.ne.s32.totalorder %s120, %s134
      %p136 = scmp.eq.s32.totalorder %s28, 0
      %p137 = por %p135, %p136
      %s139 = sadd.s32 %s138, 1
      %p142 = scmp.eq.s32.totalorder %s22, 5
      %p143 = scmp.ne.s32.totalorder %s138, %s140
      %p144 = scmp.eq.s32.totalorder %s22, 0
      %p145 = por %p143, %p144
      %p146 = scmp.ne.s32.totalorder %s138, %s140
      %p147 = scmp.eq.s32.totalorder %s27, 5
      %p148 = por %p146, %p147
      %p149 = scmp.ne.s32.totalorder %s140, %s141
      %p150 = scmp.eq.s32.totalorder %s27, 0
      %p151 = por %p149, %p150
      %p152 = scmp.ne.s32.totalorder %s140, %s141
      %p153 = scmp.eq.s32.totalorder %s28, 5
      %p154 = por %p152, %p153
      %p156 = scmp.ne.s32.totalorder %s141, %s155
      %p157 = scmp.eq.s32.totalorder %s28, 0
      %p158 = por %p156, %p157
      %s160 = sadd.s32 %s159, 1
      %p163 = scmp.eq.s32.totalorder %s22, 5
      %p164 = scmp.ne.s32.totalorder %s159, %s161
      %p165 = scmp.eq.s32.totalorder %s22, 0
      %p166 = por %p164, %p165
      %p167 = scmp.ne.s32.totalorder %s159, %s161
      %p168 = scmp.eq.s32.totalorder %s27, 5
      %p169 = por %p167, %p168
      %p170 = scmp.ne.s32.totalorder %s161, %s162
      %p171 = scmp.eq.s32.totalorder %s27, 0
      %p172 = por %p170, %p171
      %p173 = scmp.ne.s32.totalorder %s161, %s162
      %p174 = scmp.eq.s32.totalorder %s28, 5
      %p175 = por %p173, %p174
      %p177 = scmp.ne.s32.totalorder %s162, %s176
      %p178 = scmp.eq.s32.totalorder %s28, 0
      %p179 = por %p177, %p178
      %s180 = ssub.s32 %s29, %s41
      %s181 = ssub.s32 %s30, %s37
      %s182 = sor.u32 %s180, %s181
      %p183 = scmp.eq.s32.totalorder %s182, 0
      %s185 = sadd.s32 %s184, 1
      %s186 = scalar_select %p183, %s184, %s185
      %p189 = pneg %p183
      %p190 = scmp.eq.s32.totalorder %s22, 5
      %p191 = por %p189, %p190
      %p192 = scmp.ne.s32.totalorder %s184, %s187
      %p193 = scmp.eq.s32.totalorder %s22, 0
      %p194 = por %p192, %p193
      %p195 = scmp.ne.s32.totalorder %s184, %s187
      %p196 = scmp.eq.s32.totalorder %s27, 5
      %p197 = por %p195, %p196
      %p198 = scmp.ne.s32.totalorder %s187, %s188
      %p199 = scmp.eq.s32.totalorder %s27, 0
      %p200 = por %p198, %p199
      %p201 = scmp.ne.s32.totalorder %s187, %s188
      %p202 = scmp.eq.s32.totalorder %s28, 5
      %p203 = por %p201, %p202
      %p205 = scmp.ne.s32.totalorder %s188, %s204
      %p206 = scmp.eq.s32.totalorder %s28, 0
      %p207 = por %p205, %p206
      %p208 = scmp.le.s32.totalorder 1, %s22
      %p209 = scmp.lt.s32.totalorder %s22, 7
      %p210 = pnand %p208, %p209
      %p211 = pneg %p210
      // Predicated region
      $region9: #{tpu_custom_call.1} parent=5 // pred_check
        _
      $region10: #{tpu_custom_call.1} parent=5 // pred_check_branch
        %213 = sbr.rel (%p210) target = $region12
      $region11: #{tpu_custom_call.1} parent=5 // pred_region
        %s214 = ssub.s32 %s22, 1
        // Predicated region
        $region13: #{tpu_custom_call.1} parent=11 // pred_check
          %p215 = pneg %p109
        $region14: #{tpu_custom_call.1} parent=11 // pred_check_branch
          %217 = sbr.rel (%p215) target = $region16
        $region15: #{tpu_custom_call.1} parent=11 // pred_region
          %s219 = ssub.s32 512, 512
          %220 = vsyncadd [#allocation8], %s219
          %s221 = sshll.u32 [#allocation9], 4
          %s222 = int_to_ptr.vmem [resolvable:$true] %s221
          %227 = dma.hbm_to_vmem [thread:$0]  %s2, 512, %s222, [#allocation8], 128, 128, 8
        $region16: #{tpu_custom_call.1} parent=11 // pred_fallthru
          _
        // Predicated region
        $region17: #{tpu_custom_call.1} parent=11 // pred_check
          %p228 = pneg %p130
        $region18: #{tpu_custom_call.1} parent=11 // pred_check_branch
          %230 = sbr.rel (%p228) target = $region20
        $region19: #{tpu_custom_call.1} parent=11 // pred_region
          %s232 = ssub.s32 512, 512
          %233 = vsyncadd [#allocation11], %s232
          %s234 = sshll.u32 [#allocation10], 4
          %s235 = int_to_ptr.vmem [resolvable:$true] %s234
          %240 = dma.hbm_to_vmem [thread:$0]  %s3, 512, %s235, [#allocation11], 128, 128, 8
        $region20: #{tpu_custom_call.1} parent=11 // pred_fallthru
          _
        // Predicated region
        $region21: #{tpu_custom_call.1} parent=11 // pred_check
          %p241 = pneg %p151
        $region22: #{tpu_custom_call.1} parent=11 // pred_check_branch
          %243 = sbr.rel (%p241) target = $region24
        $region23: #{tpu_custom_call.1} parent=11 // pred_region
          %s245 = ssub.s32 512, 512
          %246 = vsyncadd [#allocation11], %s245
          %s247 = sshll.u32 [#allocation12], 4
          %s248 = int_to_ptr.vmem [resolvable:$true] %s247
          %253 = dma.hbm_to_vmem [thread:$0]  %s4, 512, %s248, [#allocation11], 128, 128, 8
        $region24: #{tpu_custom_call.1} parent=11 // pred_fallthru
          _
        // Predicated region
        $region25: #{tpu_custom_call.1} parent=11 // pred_check
          %p254 = pneg %p172
        $region26: #{tpu_custom_call.1} parent=11 // pred_check_branch
          %256 = sbr.rel (%p254) target = $region28
        $region27: #{tpu_custom_call.1} parent=11 // pred_region
          _
        $region28: #{tpu_custom_call.1} parent=11 // pred_fallthru
          _
      $region12: #{tpu_custom_call.1} parent=5 // pred_fallthru
        _
      %p257 = scmp.lt.s32.totalorder %s22, 6
      // Predicated region
      $region29: #{tpu_custom_call.1} parent=5 // pred_check
        %p258 = pneg %p257
      $region30: #{tpu_custom_call.1} parent=5 // pred_check_branch
        %260 = sbr.rel (%p258) target = $region32
      $region31: #{tpu_custom_call.1} parent=5 // pred_region
        // Predicated region
        $region33: #{tpu_custom_call.1} parent=31 // pred_check
          %p261 = pneg %p56
        $region34: #{tpu_custom_call.1} parent=31 // pred_check_branch
          %263 = sbr.rel (%p261) target = $region36
        $region35: #{tpu_custom_call.1} parent=31 // pred_region
          %s264 = sand.u32 %s46, 1
          %s265 = scalar_lea.sflag [#allocation5], %s264
          %s266 = sand.u32 %s46, 1
          %s267 = smul.addr %s266, 8
          %s268 = scalar_lea.vmem [#allocation4], %s267
          %s270 = ssub.s32 128, 128
          %271 = vsyncadd %s265, %s270
          %s272 = smul.addr %s29, 3
          %s273 = sadd.s32 %s30, %s272
          %s274 = smul.addr %s273, 128
          %s275 = scalar_lea.hbm %s0, %s274
          %s277 = sshll.u32 %s268, 4
          %s278 = int_to_ptr.vmem [resolvable:$true] %s277
          %280 = dma.hbm_to_vmem [thread:$0]  %s275, 128, %s278, %s265
        $region36: #{tpu_custom_call.1} parent=31 // pred_fallthru
          _
        // Predicated region
        $region37: #{tpu_custom_call.1} parent=31 // pred_check
          %p281 = pneg %p82
        $region38: #{tpu_custom_call.1} parent=31 // pred_check_branch
          %283 = sbr.rel (%p281) target = $region40
        $region39: #{tpu_custom_call.1} parent=31 // pred_region
          %s284 = sand.u32 %s22, 1
          %s285 = scalar_lea.sflag [#allocation8], %s284
          %s286 = sand.u32 %s72, 1
          %s287 = smul.addr %s286, 16
          %s288 = scalar_lea.vmem [#allocation7], %s287
          %s290 = ssub.s32 256, 256
          %291 = vsyncadd %s285, %s290
          %s292 = smul.addr %s29, 2
          %s293 = smul.addr %s292, 128
          %s294 = scalar_lea.hbm %s1, %s293
          %s295 = sshll.u32 %s288, 4
          %s296 = int_to_ptr.vmem [resolvable:$true] %s295
          %301 = dma.hbm_to_vmem [thread:$0]  %s294, 256, %s296, %s285, 128, 128, 8
        $region40: #{tpu_custom_call.1} parent=31 // pred_fallthru
          _
      $region32: #{tpu_custom_call.1} parent=5 // pred_fallthru
        _
      %p302 = scmp.le.s32.totalorder 1, %s22
      %p303 = scmp.lt.s32.totalorder %s22, 7
      %p304 = pnand %p302, %p303
      %p305 = pneg %p304
      // Predicated region
      $region41: #{tpu_custom_call.1} parent=5 // pred_check
        _
      $region42: #{tpu_custom_call.1} parent=5 // pred_check_branch
        %307 = sbr.rel (%p304) target = $region44
      $region43: #{tpu_custom_call.1} parent=5 // pred_region
        %s308 = ssub.s32 %s22, 1
        %s309 = sand.u32 %s49, 1
        %s310 = scalar_lea.sflag [#allocation5], %s309
        %s311 = sand.u32 %s49, 1
        %s312 = smul.addr %s311, 8
        %s313 = scalar_lea.vmem [#allocation4], %s312
        // Predicated region
        $region45: #{tpu_custom_call.1} parent=43 // pred_check
          %p314 = pneg %p62
        $region46: #{tpu_custom_call.1} parent=43 // pred_check_branch
          %316 = sbr.rel (%p314) target = $region48
        $region47: #{tpu_custom_call.1} parent=43 // pred_region
          %317 = dma.done %s310, 128
        $region48: #{tpu_custom_call.1} parent=43 // pred_fallthru
          _
        %s318 = sand.u32 %s27, 1
        %s319 = scalar_lea.sflag [#allocation8], %s318
        %s320 = sand.u32 %s75, 1
        %s321 = smul.addr %s320, 16
        %s322 = scalar_lea.vmem [#allocation7], %s321
        // Predicated region
        $region49: #{tpu_custom_call.1} parent=43 // pred_check
          %p323 = pneg %p88
        $region50: #{tpu_custom_call.1} parent=43 // pred_check_branch
          %325 = sbr.rel (%p323) target = $region52
        $region51: #{tpu_custom_call.1} parent=43 // pred_region
          %326 = dma.done %s319, 256
        $region52: #{tpu_custom_call.1} parent=43 // pred_fallthru
          _
        // Predicated region
        $region53: #{tpu_custom_call.1} parent=43 // pred_check
          %p327 = pneg %p109
        $region54: #{tpu_custom_call.1} parent=43 // pred_check_branch
          %329 = sbr.rel (%p327) target = $region56
        $region55: #{tpu_custom_call.1} parent=43 // pred_region
          %330 = dma.done [#allocation8], 512
        $region56: #{tpu_custom_call.1} parent=43 // pred_fallthru
          _
        // Predicated region
        $region57: #{tpu_custom_call.1} parent=43 // pred_check
          %p331 = pneg %p130
        $region58: #{tpu_custom_call.1} parent=43 // pred_check_branch
          %333 = sbr.rel (%p331) target = $region60
        $region59: #{tpu_custom_call.1} parent=43 // pred_region
          %334 = dma.done [#allocation11], 512
        $region60: #{tpu_custom_call.1} parent=43 // pred_fallthru
          _
        // Predicated region
        $region61: #{tpu_custom_call.1} parent=43 // pred_check
          %p335 = pneg %p151
        $region62: #{tpu_custom_call.1} parent=43 // pred_check_branch
          %337 = sbr.rel (%p335) target = $region64
        $region63: #{tpu_custom_call.1} parent=43 // pred_region
          %338 = dma.done [#allocation11], 512
        $region64: #{tpu_custom_call.1} parent=43 // pred_fallthru
          _
        %s339 = sand.u32 %s49, 1
        %s340 = scalar_lea.sflag [#allocation5], %s339
        %s341 = sand.u32 %s49, 1
        %s342 = smul.addr %s341, 8
        %s343 = scalar_lea.vmem [#allocation4], %s342
        %p344 = pneg %p62
        %p345 = pneg %p59
        %s346 = sand.u32 %s27, 1
        %s347 = scalar_lea.sflag [#allocation8], %s346
        %s348 = sand.u32 %s75, 1
        %s349 = smul.addr %s348, 16
        %s350 = scalar_lea.vmem [#allocation7], %s349
        %p351 = pneg %p88
        %p352 = pneg %p85
        %p353 = pneg %p109
        %p354 = pneg %p106
        %p355 = pneg %p130
        %p356 = pneg %p127
        %p357 = pneg %p151
        %p358 = pneg %p148
        %p359 = pneg %p172
        %p360 = pneg %p169
        %p361 = pneg %p200
        %p362 = pneg %p197
        %s363 = sand.u32 %s187, 1
        %s364 = scalar_lea.sflag [#allocation6], %s363
        %s365 = sand.u32 %s187, 1
        %s366 = smul.addr %s365, 8
        %s367 = scalar_lea.vmem [#allocation13], %s366
        %p368 = scmp.eq.s32.totalorder %s32, 0
        // Predicated region
        $region65: #{tpu_custom_call.1} parent=43 // pred_check
          %p369 = pneg %p368
        $region66: #{tpu_custom_call.1} parent=43 // pred_check_branch
          %371 = sbr.rel (%p369) target = $region68
        $region67: #{tpu_custom_call.1} parent=43 // pred_region
          %v372 = vld [vmem:[%s322] sm:$0xff]
          %v373 = vld [vmem:[%s322 + $0x8] sm:$0xff]
          %v374 = vld [vmem:[#allocation10] sm:$0xff]
          %v375 = vld [vmem:[#allocation10 + $0x8] sm:$0xff]
          %v376 = vld [vmem:[#allocation10 + $0x10] sm:$0xff]
          %v377 = vld [vmem:[#allocation10 + $0x18] sm:$0xff]
          %vm378 = vcmask 261120
          %v380 = vsel %vm378, %v372, 0
          %v383 = vsel %vm378, %v373, 0
          %385 = vmatprep.subr.mxu0 0.0
          %386 = vmatpush1.msra.mxu0 %v374
          %387 = vmatprep.subr.mxu0 0.0
          %388 = vmatpush1.msra.mxu0 %v375
          %389 = vmatprep.subr.mxu0 0.0
          %390 = vmatpush1.msra.mxu0 %v376
          %391 = vmatprep.subr.mxu0 0.0
          %392 = vmatpush1.msra.mxu0 %v377
          %393 = vmatprep.subr.mxu0 0.0
          %394 = vmatpush1.msra.mxu0 0.0
          %395 = vmatprep.subr.mxu0 0.0
          %396 = vmatpush1.msra.mxu0 0.0
          %397 = vmatprep.subr.mxu0 0.0
          %398 = vmatpush1.msra.mxu0 0.0
          %399 = vmatprep.subr.mxu0 0.0
          %400 = vmatpush1.msra.mxu0 0.0
          %401 = vmatprep.subr.mxu0 0.0
          %402 = vmatpush1.msra.mxu0 0.0
          %403 = vmatprep.subr.mxu0 0.0
          %404 = vmatpush1.msra.mxu0 0.0
          %405 = vmatprep.subr.mxu0 0.0
          %406 = vmatpush1.msra.mxu0 0.0
          %407 = vmatprep.subr.mxu0 0.0
          %408 = vmatpush1.msra.mxu0 0.0
          %409 = vmatprep.subr.mxu0 0.0
          %410 = vmatpush1.msra.mxu0 0.0
          %411 = vmatprep.subr.mxu0 0.0
          %412 = vmatpush1.msra.mxu0 0.0
          %413 = vmatprep.subr.mxu0 0.0
          %414 = vmatpush1.msra.mxu0 0.0
          %415 = vmatprep.subr.mxu0 0.0
          %416 = vmatpush1.msra.mxu0 0.0
          %417 = vmatprep.subr.mxu0 0.0
          %418 = vmatpush1.msra.mxu0 0.0
          %419 = vmatprep.subr.mxu0 0.0
          %420 = vmatpush1.msra.mxu0 0.0
          %421 = vmatprep.subr.mxu0 0.0
          %422 = vmatpush1.msra.mxu0 0.0
          %423 = vmatprep.subr.mxu0 0.0
          %424 = vmatpush1.msra.mxu0 0.0
          %425 = vmatprep.subr.mxu0 0.0
          %426 = vmatpush1.msra.mxu0 0.0
          %427 = vmatprep.subr.mxu0 0.0
          %428 = vmatpush1.msra.mxu0 0.0
          %429 = vmatprep.subr.mxu0 0.0
          %430 = vmatpush1.msra.mxu0 0.0
          %431 = vmatprep.subr.mxu0 0.0
          %432 = vmatpush1.msra.mxu0 0.0
          %433 = vmatprep.subr.mxu0 0.0
          %434 = vmatpush1.msra.mxu0 0.0
          %435 = vmatprep.subr.mxu0 0.0
          %436 = vmatpush1.msra.mxu0 0.0
          %437 = vmatprep.subr.mxu0 0.0
          %438 = vmatpush1.msra.mxu0 0.0
          %439 = vmatprep.subr.mxu0 0.0
          %440 = vmatpush1.msra.mxu0 0.0
          %441 = vmatprep.subr.mxu0 0.0
          %442 = vmatpush1.msra.mxu0 0.0
          %443 = vmatprep.subr.mxu0 0.0
          %444 = vmatpush1.msra.mxu0 0.0
          %445 = vmatprep.subr.mxu0 0.0
          %446 = vmatpush1.msra.mxu0 0.0
          %447 = vmatprep.subr.mxu0 0.0
          %448 = vmatpush1.msra.mxu0 0.0
          %449 = vmatprep.mubr.f32.mxu0 0.0
          %450 = vmatmul.mubr.f32.gmra.mrb[0].mxu0 %v380
          %v451 = vpop.f32.mrb[0].mxu0
          %v452 = vadd.f32 0.0, %v451
          %v453 = vpop.f32.mrb[0].mxu0
          %454 = vmatprep.mubr.f32.mxu0 0.0
          %455 = vmatmul.mubr.f32.gmra.mrb[0].mxu0 %v383
          %v456 = vpop.f32.mrb[0].mxu0
          %v457 = vadd.f32 0.0, %v456
          %v458 = vpop.f32.mrb[0].mxu0
          %459 = vdwg.mxu0
          %vm460 = vcmask 523264
          %461 = vst.msk [vmem:[#allocation2] sm:$0xff] %vm460, %v452
          %462 = vst.msk [vmem:[#allocation2 + $0x8] sm:$0xff] %vm460, %v457
        $region68: #{tpu_custom_call.1} parent=43 // pred_fallthru
          _
        %v463 = vld [vmem:[%s313] sm:$0xff]
        %v464 = vld [vmem:[#allocation9] sm:$0xff]
        %v465 = vld [vmem:[#allocation9 + $0x8] sm:$0xff]
        %v466 = vld [vmem:[#allocation9 + $0x10] sm:$0xff]
        %v467 = vld [vmem:[#allocation9 + $0x18] sm:$0xff]
        %vm468 = vcmask 261120
        %v470 = vsel %vm468, %v463, 0
        %472 = vmatprep.subr.mxu0 0.0
        %473 = vmatpush1.msra.mxu0 %v464
        %474 = vmatprep.subr.mxu0 0.0
        %475 = vmatpush1.msra.mxu0 %v465
        %476 = vmatprep.subr.mxu0 0.0
        %477 = vmatpush1.msra.mxu0 %v466
        %478 = vmatprep.subr.mxu0 0.0
        %479 = vmatpush1.msra.mxu0 %v467
        %480 = vmatprep.subr.mxu0 0.0
        %481 = vmatpush1.msra.mxu0 0.0
        %482 = vmatprep.subr.mxu0 0.0
        %483 = vmatpush1.msra.mxu0 0.0
        %484 = vmatprep.subr.mxu0 0.0
        %485 = vmatpush1.msra.mxu0 0.0
        %486 = vmatprep.subr.mxu0 0.0
        %487 = vmatpush1.msra.mxu0 0.0
        %488 = vmatprep.subr.mxu0 0.0
        %489 = vmatpush1.msra.mxu0 0.0
        %490 = vmatprep.subr.mxu0 0.0
        %491 = vmatpush1.msra.mxu0 0.0
        %492 = vmatprep.subr.mxu0 0.0
        %493 = vmatpush1.msra.mxu0 0.0
        %494 = vmatprep.subr.mxu0 0.0
        %495 = vmatpush1.msra.mxu0 0.0
        %496 = vmatprep.subr.mxu0 0.0
        %497 = vmatpush1.msra.mxu0 0.0
        %498 = vmatprep.subr.mxu0 0.0
        %499 = vmatpush1.msra.mxu0 0.0
        %500 = vmatprep.subr.mxu0 0.0
        %501 = vmatpush1.msra.mxu0 0.0
        %502 = vmatprep.subr.mxu0 0.0
        %503 = vmatpush1.msra.mxu0 0.0
        %504 = vmatprep.subr.mxu0 0.0
        %505 = vmatpush1.msra.mxu0 0.0
        %506 = vmatprep.subr.mxu0 0.0
        %507 = vmatpush1.msra.mxu0 0.0
        %508 = vmatprep.subr.mxu0 0.0
        %509 = vmatpush1.msra.mxu0 0.0
        %510 = vmatprep.subr.mxu0 0.0
        %511 = vmatpush1.msra.mxu0 0.0
        %512 = vmatprep.subr.mxu0 0.0
        %513 = vmatpush1.msra.mxu0 0.0
        %514 = vmatprep.subr.mxu0 0.0
        %515 = vmatpush1.msra.mxu0 0.0
        %516 = vmatprep.subr.mxu0 0.0
        %517 = vmatpush1.msra.mxu0 0.0
        %518 = vmatprep.subr.mxu0 0.0
        %519 = vmatpush1.msra.mxu0 0.0
        %520 = vmatprep.subr.mxu0 0.0
        %521 = vmatpush1.msra.mxu0 0.0
        %522 = vmatprep.subr.mxu0 0.0
        %523 = vmatpush1.msra.mxu0 0.0
        %524 = vmatprep.subr.mxu0 0.0
        %525 = vmatpush1.msra.mxu0 0.0
        %526 = vmatprep.subr.mxu0 0.0
        %527 = vmatpush1.msra.mxu0 0.0
        %528 = vmatprep.subr.mxu0 0.0
        %529 = vmatpush1.msra.mxu0 0.0
        %530 = vmatprep.subr.mxu0 0.0
        %531 = vmatpush1.msra.mxu0 0.0
        %532 = vmatprep.subr.mxu0 0.0
        %533 = vmatpush1.msra.mxu0 0.0
        %534 = vmatprep.subr.mxu0 0.0
        %535 = vmatpush1.msra.mxu0 0.0
        %536 = vmatprep.mubr.f32.mxu0 0.0
        %537 = vmatmul.mubr.f32.gmra.mrb[0].mxu0 %v470
        %v538 = vpop.f32.mrb[0].mxu0
        %v539 = vadd.f32 0.0, %v538
        %v540 = vpop.f32.mrb[0].mxu0
        %541 = vdwg.mxu0
        %v542 = vld [vmem:[#allocation2] sm:$0xff]
        %v543 = vld [vmem:[#allocation2 + $0x8] sm:$0xff]
        %vm544 = vcmask 130048
        %v546 = vsel %vm544, %v539, 0
        %v549 = vsel %vm544, %v542, 0
        %v552 = vsel %vm544, %v543, 0
        %554 = vmatprep.subr.mxu0 0.0
        %555 = vmatpush1.xpose.msra.mxu0 %v549
        %556 = vmatprep.subr.mxu0 0.0
        %557 = vmatpush1.xpose.msra.mxu0 %v552
        %558 = vmatprep.subr.mxu0 0.0
        %559 = vmatpush1.xpose.msra.mxu0 0.0
        %560 = vmatprep.subr.mxu0 0.0
        %561 = vmatpush1.xpose.msra.mxu0 0.0
        %562 = vmatprep.subr.mxu0 0.0
        %563 = vmatpush1.xpose.msra.mxu0 0.0
        %564 = vmatprep.subr.mxu0 0.0
        %565 = vmatpush1.xpose.msra.mxu0 0.0
        %566 = vmatprep.subr.mxu0 0.0
        %567 = vmatpush1.xpose.msra.mxu0 0.0
        %568 = vmatprep.subr.mxu0 0.0
        %569 = vmatpush1.xpose.msra.mxu0 0.0
        %570 = vmatprep.subr.mxu0 0.0
        %571 = vmatpush1.xpose.msra.mxu0 0.0
        %572 = vmatprep.subr.mxu0 0.0
        %573 = vmatpush1.xpose.msra.mxu0 0.0
        %574 = vmatprep.subr.mxu0 0.0
        %575 = vmatpush1.xpose.msra.mxu0 0.0
        %576 = vmatprep.subr.mxu0 0.0
        %577 = vmatpush1.xpose.msra.mxu0 0.0
        %578 = vmatprep.subr.mxu0 0.0
        %579 = vmatpush1.xpose.msra.mxu0 0.0
        %580 = vmatprep.subr.mxu0 0.0
        %581 = vmatpush1.xpose.msra.mxu0 0.0
        %582 = vmatprep.subr.mxu0 0.0
        %583 = vmatpush1.xpose.msra.mxu0 0.0
        %584 = vmatprep.subr.mxu0 0.0
        %585 = vmatpush1.xpose.msra.mxu0 0.0
        %586 = vmatprep.subr.mxu0 0.0
        %587 = vmatpush1.xpose.msra.mxu0 0.0
        %588 = vmatprep.subr.mxu0 0.0
        %589 = vmatpush1.xpose.msra.mxu0 0.0
        %590 = vmatprep.subr.mxu0 0.0
        %591 = vmatpush1.xpose.msra.mxu0 0.0
        %592 = vmatprep.subr.mxu0 0.0
        %593 = vmatpush1.xpose.msra.mxu0 0.0
        %594 = vmatprep.subr.mxu0 0.0
        %595 = vmatpush1.xpose.msra.mxu0 0.0
        %596 = vmatprep.subr.mxu0 0.0
        %597 = vmatpush1.xpose.msra.mxu0 0.0
        %598 = vmatprep.subr.mxu0 0.0
        %599 = vmatpush1.xpose.msra.mxu0 0.0
        %600 = vmatprep.subr.mxu0 0.0
        %601 = vmatpush1.xpose.msra.mxu0 0.0
        %602 = vmatprep.subr.mxu0 0.0
        %603 = vmatpush1.xpose.msra.mxu0 0.0
        %604 = vmatprep.subr.mxu0 0.0
        %605 = vmatpush1.xpose.msra.mxu0 0.0
        %606 = vmatprep.subr.mxu0 0.0
        %607 = vmatpush1.xpose.msra.mxu0 0.0
        %608 = vmatprep.subr.mxu0 0.0
        %609 = vmatpush1.xpose.msra.mxu0 0.0
        %610 = vmatprep.subr.mxu0 0.0
        %611 = vmatpush1.xpose.msra.mxu0 0.0
        %612 = vmatprep.subr.mxu0 0.0
        %613 = vmatpush1.xpose.msra.mxu0 0.0
        %614 = vmatprep.subr.mxu0 0.0
        %615 = vmatpush1.xpose.msra.mxu0 0.0
        %616 = vmatprep.subr.mxu0 0.0
        %617 = vmatpush1.xpose.msra.mxu0 0.0
        %618 = vmatprep.mubr.f32.mxu0 0.0
        %619 = vmatmul.mubr.f32.gmra.mrb[0].mxu0 %v546
        %v620 = vpop.f32.mrb[0].mxu0
        %v621 = vadd.f32 0.0, %v620
        %v622 = vpop.f32.mrb[0].mxu0
        %623 = vdwg.mxu0
        %v624 = vsel %vm544, %v621, -inf
        %625 = vmax.xlane.f32.xlu0 %v624
        %v626 = vpop.xlane.xlu0 %625
        %v627 = vsub.f32 %v621, %v626
        %v628 = vmul.f32 %v627, 1.442695
        %v629 = vpow.pop %v628
        %v630 = vsel %vm544, %v629, 0.0
        %631 = vadd.xlane.f32.xlu0 %v630
        %v632 = vpop.xlane.xlu0 %631
        %v633 = vrcp.pop %v632
        %v634 = vmul.f32 %v632, %v633
        %v635 = vsub.f32 2.0, %v634
        %v636 = vmul.f32 %v633, %v635
        %v637 = vmul.f32 %v629, %v636
        %638 = vrot.lane.b32.xlu0 %v542, 96
        %v639 = vpop.permute.xlu0 %638
        %640 = vrot.lane.b32.xlu0 %v543, 96
        %v641 = vpop.permute.xlu0 %640
        %v645 = vsel %vm544, %v637, 0
        %647 = vmatprep.subr.mxu0 0.0
        %648 = vmatpush1.msra.mxu0 %v639
        %649 = vmatprep.subr.mxu0 0.0
        %650 = vmatpush1.msra.mxu0 %v641
        %651 = vmatprep.subr.mxu0 0.0
        %652 = vmatpush1.msra.mxu0 0.0
        %653 = vmatprep.subr.mxu0 0.0
        %654 = vmatpush1.msra.mxu0 0.0
        %655 = vmatprep.subr.mxu0 0.0
        %656 = vmatpush1.msra.mxu0 0.0
        %657 = vmatprep.subr.mxu0 0.0
        %658 = vmatpush1.msra.mxu0 0.0
        %659 = vmatprep.subr.mxu0 0.0
        %660 = vmatpush1.msra.mxu0 0.0
        %661 = vmatprep.subr.mxu0 0.0
        %662 = vmatpush1.msra.mxu0 0.0
        %663 = vmatprep.subr.mxu0 0.0
        %664 = vmatpush1.msra.mxu0 0.0
        %665 = vmatprep.subr.mxu0 0.0
        %666 = vmatpush1.msra.mxu0 0.0
        %667 = vmatprep.subr.mxu0 0.0
        %668 = vmatpush1.msra.mxu0 0.0
        %669 = vmatprep.subr.mxu0 0.0
        %670 = vmatpush1.msra.mxu0 0.0
        %671 = vmatprep.subr.mxu0 0.0
        %672 = vmatpush1.msra.mxu0 0.0
        %673 = vmatprep.subr.mxu0 0.0
        %674 = vmatpush1.msra.mxu0 0.0
        %675 = vmatprep.subr.mxu0 0.0
        %676 = vmatpush1.msra.mxu0 0.0
        %677 = vmatprep.subr.mxu0 0.0
        %678 = vmatpush1.msra.mxu0 0.0
        %679 = vmatprep.subr.mxu0 0.0
        %680 = vmatpush1.msra.mxu0 0.0
        %681 = vmatprep.subr.mxu0 0.0
        %682 = vmatpush1.msra.mxu0 0.0
        %683 = vmatprep.subr.mxu0 0.0
        %684 = vmatpush1.msra.mxu0 0.0
        %685 = vmatprep.subr.mxu0 0.0
        %686 = vmatpush1.msra.mxu0 0.0
        %687 = vmatprep.subr.mxu0 0.0
        %688 = vmatpush1.msra.mxu0 0.0
        %689 = vmatprep.subr.mxu0 0.0
        %690 = vmatpush1.msra.mxu0 0.0
        %691 = vmatprep.subr.mxu0 0.0
        %692 = vmatpush1.msra.mxu0 0.0
        %693 = vmatprep.subr.mxu0 0.0
        %694 = vmatpush1.msra.mxu0 0.0
        %695 = vmatprep.subr.mxu0 0.0
        %696 = vmatpush1.msra.mxu0 0.0
        %697 = vmatprep.subr.mxu0 0.0
        %698 = vmatpush1.msra.mxu0 0.0
        %699 = vmatprep.subr.mxu0 0.0
        %700 = vmatpush1.msra.mxu0 0.0
        %701 = vmatprep.subr.mxu0 0.0
        %702 = vmatpush1.msra.mxu0 0.0
        %703 = vmatprep.subr.mxu0 0.0
        %704 = vmatpush1.msra.mxu0 0.0
        %705 = vmatprep.subr.mxu0 0.0
        %706 = vmatpush1.msra.mxu0 0.0
        %707 = vmatprep.subr.mxu0 0.0
        %708 = vmatpush1.msra.mxu0 0.0
        %709 = vmatprep.subr.mxu0 0.0
        %710 = vmatpush1.msra.mxu0 0.0
        %711 = vmatprep.mubr.f32.mxu0 0.0
        %712 = vmatmul.mubr.f32.gmra.mrb[0].mxu0 %v645
        %v713 = vpop.f32.mrb[0].mxu0
        %v714 = vadd.f32 0.0, %v713
        %v715 = vpop.f32.mrb[0].mxu0
        %716 = vdwg.mxu0
        %717 = vst.msk [vmem:[#allocation3] sm:$0xff] %vm544, %v714
        %v718 = vld [vmem:[#allocation2] sm:$0xff]
        %v719 = vld [vmem:[#allocation2 + $0x8] sm:$0xff]
        %720 = vrot.lane.b32.xlu0 %v539, 112
        %v721 = vpop.permute.xlu0 %720
        %724 = vrot.lane.b32.xlu0 %v718, 112
        %v725 = vpop.permute.xlu0 %724
        %726 = vrot.lane.b32.xlu0 %v719, 112
        %v727 = vpop.permute.xlu0 %726
        %v728 = vsel %vm544, %v721, 0
        %v730 = vsel %vm544, %v725, 0
        %v732 = vsel %vm544, %v727, 0
        %734 = vmatprep.subr.mxu0 0.0
        %735 = vmatpush1.xpose.msra.mxu0 %v730
        %736 = vmatprep.subr.mxu0 0.0
        %737 = vmatpush1.xpose.msra.mxu0 %v732
        %738 = vmatprep.subr.mxu0 0.0
        %739 = vmatpush1.xpose.msra.mxu0 0.0
        %740 = vmatprep.subr.mxu0 0.0
        %741 = vmatpush1.xpose.msra.mxu0 0.0
        %742 = vmatprep.subr.mxu0 0.0
        %743 = vmatpush1.xpose.msra.mxu0 0.0
        %744 = vmatprep.subr.mxu0 0.0
        %745 = vmatpush1.xpose.msra.mxu0 0.0
        %746 = vmatprep.subr.mxu0 0.0
        %747 = vmatpush1.xpose.msra.mxu0 0.0
        %748 = vmatprep.subr.mxu0 0.0
        %749 = vmatpush1.xpose.msra.mxu0 0.0
        %750 = vmatprep.subr.mxu0 0.0
        %751 = vmatpush1.xpose.msra.mxu0 0.0
        %752 = vmatprep.subr.mxu0 0.0
        %753 = vmatpush1.xpose.msra.mxu0 0.0
        %754 = vmatprep.subr.mxu0 0.0
        %755 = vmatpush1.xpose.msra.mxu0 0.0
        %756 = vmatprep.subr.mxu0 0.0
        %757 = vmatpush1.xpose.msra.mxu0 0.0
        %758 = vmatprep.subr.mxu0 0.0
        %759 = vmatpush1.xpose.msra.mxu0 0.0
        %760 = vmatprep.subr.mxu0 0.0
        %761 = vmatpush1.xpose.msra.mxu0 0.0
        %762 = vmatprep.subr.mxu0 0.0
        %763 = vmatpush1.xpose.msra.mxu0 0.0
        %764 = vmatprep.subr.mxu0 0.0
        %765 = vmatpush1.xpose.msra.mxu0 0.0
        %766 = vmatprep.subr.mxu0 0.0
        %767 = vmatpush1.xpose.msra.mxu0 0.0
        %768 = vmatprep.subr.mxu0 0.0
        %769 = vmatpush1.xpose.msra.mxu0 0.0
        %770 = vmatprep.subr.mxu0 0.0
        %771 = vmatpush1.xpose.msra.mxu0 0.0
        %772 = vmatprep.subr.mxu0 0.0
        %773 = vmatpush1.xpose.msra.mxu0 0.0
        %774 = vmatprep.subr.mxu0 0.0
        %775 = vmatpush1.xpose.msra.mxu0 0.0
        %776 = vmatprep.subr.mxu0 0.0
        %777 = vmatpush1.xpose.msra.mxu0 0.0
        %778 = vmatprep.subr.mxu0 0.0
        %779 = vmatpush1.xpose.msra.mxu0 0.0
        %780 = vmatprep.subr.mxu0 0.0
        %781 = vmatpush1.xpose.msra.mxu0 0.0
        %782 = vmatprep.subr.mxu0 0.0
        %783 = vmatpush1.xpose.msra.mxu0 0.0
        %784 = vmatprep.subr.mxu0 0.0
        %785 = vmatpush1.xpose.msra.mxu0 0.0
        %786 = vmatprep.subr.mxu0 0.0
        %787 = vmatpush1.xpose.msra.mxu0 0.0
        %788 = vmatprep.subr.mxu0 0.0
        %789 = vmatpush1.xpose.msra.mxu0 0.0
        %790 = vmatprep.subr.mxu0 0.0
        %791 = vmatpush1.xpose.msra.mxu0 0.0
        %792 = vmatprep.subr.mxu0 0.0
        %793 = vmatpush1.xpose.msra.mxu0 0.0
        %794 = vmatprep.subr.mxu0 0.0
        %795 = vmatpush1.xpose.msra.mxu0 0.0
        %796 = vmatprep.subr.mxu0 0.0
        %797 = vmatpush1.xpose.msra.mxu0 0.0
        %798 = vmatprep.mubr.f32.mxu0 0.0
        %799 = vmatmul.mubr.f32.gmra.mrb[0].mxu0 %v728
        %v800 = vpop.f32.mrb[0].mxu0
        %v801 = vadd.f32 0.0, %v800
        %v802 = vpop.f32.mrb[0].mxu0
        %803 = vdwg.mxu0
        %v804 = vsel %vm544, %v801, -inf
        %805 = vmax.xlane.f32.xlu0 %v804
        %v806 = vpop.xlane.xlu0 %805
        %v807 = vsub.f32 %v801, %v806
        %v808 = vmul.f32 %v807, 1.442695
        %v809 = vpow.pop %v808
        %v810 = vsel %vm544, %v809, 0.0
        %811 = vadd.xlane.f32.xlu0 %v810
        %v812 = vpop.xlane.xlu0 %811
        %v813 = vrcp.pop %v812
        %v814 = vmul.f32 %v812, %v813
        %v815 = vsub.f32 2.0, %v814
        %v816 = vmul.f32 %v813, %v815
        %v817 = vmul.f32 %v809, %v816
        %818 = vrot.lane.b32.xlu0 %v718, 80
        %v819 = vpop.permute.xlu0 %818
        %820 = vrot.lane.b32.xlu0 %v719, 80
        %v821 = vpop.permute.xlu0 %820
        %v825 = vsel %vm544, %v817, 0
        %827 = vmatprep.subr.mxu0 0.0
        %828 = vmatpush1.msra.mxu0 %v819
        %829 = vmatprep.subr.mxu0 0.0
        %830 = vmatpush1.msra.mxu0 %v821
        %831 = vmatprep.subr.mxu0 0.0
        %832 = vmatpush1.msra.mxu0 0.0
        %833 = vmatprep.subr.mxu0 0.0
        %834 = vmatpush1.msra.mxu0 0.0
        %835 = vmatprep.subr.mxu0 0.0
        %836 = vmatpush1.msra.mxu0 0.0
        %837 = vmatprep.subr.mxu0 0.0
        %838 = vmatpush1.msra.mxu0 0.0
        %839 = vmatprep.subr.mxu0 0.0
        %840 = vmatpush1.msra.mxu0 0.0
        %841 = vmatprep.subr.mxu0 0.0
        %842 = vmatpush1.msra.mxu0 0.0
        %843 = vmatprep.subr.mxu0 0.0
        %844 = vmatpush1.msra.mxu0 0.0
        %845 = vmatprep.subr.mxu0 0.0
        %846 = vmatpush1.msra.mxu0 0.0
        %847 = vmatprep.subr.mxu0 0.0
        %848 = vmatpush1.msra.mxu0 0.0
        %849 = vmatprep.subr.mxu0 0.0
        %850 = vmatpush1.msra.mxu0 0.0
        %851 = vmatprep.subr.mxu0 0.0
        %852 = vmatpush1.msra.mxu0 0.0
        %853 = vmatprep.subr.mxu0 0.0
        %854 = vmatpush1.msra.mxu0 0.0
        %855 = vmatprep.subr.mxu0 0.0
        %856 = vmatpush1.msra.mxu0 0.0
        %857 = vmatprep.subr.mxu0 0.0
        %858 = vmatpush1.msra.mxu0 0.0
        %859 = vmatprep.subr.mxu0 0.0
        %860 = vmatpush1.msra.mxu0 0.0
        %861 = vmatprep.subr.mxu0 0.0
        %862 = vmatpush1.msra.mxu0 0.0
        %863 = vmatprep.subr.mxu0 0.0
        %864 = vmatpush1.msra.mxu0 0.0
        %865 = vmatprep.subr.mxu0 0.0
        %866 = vmatpush1.msra.mxu0 0.0
        %867 = vmatprep.subr.mxu0 0.0
        %868 = vmatpush1.msra.mxu0 0.0
        %869 = vmatprep.subr.mxu0 0.0
        %870 = vmatpush1.msra.mxu0 0.0
        %871 = vmatprep.subr.mxu0 0.0
        %872 = vmatpush1.msra.mxu0 0.0
        %873 = vmatprep.subr.mxu0 0.0
        %874 = vmatpush1.msra.mxu0 0.0
        %875 = vmatprep.subr.mxu0 0.0
        %876 = vmatpush1.msra.mxu0 0.0
        %877 = vmatprep.subr.mxu0 0.0
        %878 = vmatpush1.msra.mxu0 0.0
        %879 = vmatprep.subr.mxu0 0.0
        %880 = vmatpush1.msra.mxu0 0.0
        %881 = vmatprep.subr.mxu0 0.0
        %882 = vmatpush1.msra.mxu0 0.0
        %883 = vmatprep.subr.mxu0 0.0
        %884 = vmatpush1.msra.mxu0 0.0
        %885 = vmatprep.subr.mxu0 0.0
        %886 = vmatpush1.msra.mxu0 0.0
        %887 = vmatprep.subr.mxu0 0.0
        %888 = vmatpush1.msra.mxu0 0.0
        %889 = vmatprep.subr.mxu0 0.0
        %890 = vmatpush1.msra.mxu0 0.0
        %891 = vmatprep.mubr.f32.mxu0 0.0
        %892 = vmatmul.mubr.f32.gmra.mrb[0].mxu0 %v825
        %v893 = vpop.f32.mrb[0].mxu0
        %v894 = vadd.f32 0.0, %v893
        %v895 = vpop.f32.mrb[0].mxu0
        %896 = vdwg.mxu0
        %898 = vrot.lane.b32.xlu0 %v894, 16
        %v899 = vpop.permute.xlu0 %898
        %vm901 = vcmask 261248
        %902 = vst.msk [vmem:[#allocation3] sm:$0xff] %vm901, %v899
        %v903 = vld [vmem:[#allocation3] sm:$0xff]
        %v904 = vld [vmem:[#allocation12] sm:$0xff]
        %v905 = vld [vmem:[#allocation12 + $0x8] sm:$0xff]
        %v906 = vld [vmem:[#allocation12 + $0x10] sm:$0xff]
        %v907 = vld [vmem:[#allocation12 + $0x18] sm:$0xff]
        %v908 = vld [vmem:[%s5] sm:$0x1]
        %v910 = vlaneseq
        %v911 = vshrl.u32 %v910, 7
        %v912 = vsub.s32 0, %v911
        %v913 = vrot.slane %v908, %v912
        %v916 = vsel %vm468, %v903, 0
        %918 = vmatprep.subr.mxu0 0.0
        %919 = vmatpush1.msra.mxu0 %v904
        %920 = vmatprep.subr.mxu0 0.0
        %921 = vmatpush1.msra.mxu0 %v905
        %922 = vmatprep.subr.mxu0 0.0
        %923 = vmatpush1.msra.mxu0 %v906
        %924 = vmatprep.subr.mxu0 0.0
        %925 = vmatpush1.msra.mxu0 %v907
        %926 = vmatprep.subr.mxu0 0.0
        %927 = vmatpush1.msra.mxu0 0.0
        %928 = vmatprep.subr.mxu0 0.0
        %929 = vmatpush1.msra.mxu0 0.0
        %930 = vmatprep.subr.mxu0 0.0
        %931 = vmatpush1.msra.mxu0 0.0
        %932 = vmatprep.subr.mxu0 0.0
        %933 = vmatpush1.msra.mxu0 0.0
        %934 = vmatprep.subr.mxu0 0.0
        %935 = vmatpush1.msra.mxu0 0.0
        %936 = vmatprep.subr.mxu0 0.0
        %937 = vmatpush1.msra.mxu0 0.0
        %938 = vmatprep.subr.mxu0 0.0
        %939 = vmatpush1.msra.mxu0 0.0
        %940 = vmatprep.subr.mxu0 0.0
        %941 = vmatpush1.msra.mxu0 0.0
        %942 = vmatprep.subr.mxu0 0.0
        %943 = vmatpush1.msra.mxu0 0.0
        %944 = vmatprep.subr.mxu0 0.0
        %945 = vmatpush1.msra.mxu0 0.0
        %946 = vmatprep.subr.mxu0 0.0
        %947 = vmatpush1.msra.mxu0 0.0
        %948 = vmatprep.subr.mxu0 0.0
        %949 = vmatpush1.msra.mxu0 0.0
        %950 = vmatprep.subr.mxu0 0.0
        %951 = vmatpush1.msra.mxu0 0.0
        %952 = vmatprep.subr.mxu0 0.0
        %953 = vmatpush1.msra.mxu0 0.0
        %954 = vmatprep.subr.mxu0 0.0
        %955 = vmatpush1.msra.mxu0 0.0
        %956 = vmatprep.subr.mxu0 0.0
        %957 = vmatpush1.msra.mxu0 0.0
        %958 = vmatprep.subr.mxu0 0.0
        %959 = vmatpush1.msra.mxu0 0.0
        %960 = vmatprep.subr.mxu0 0.0
        %961 = vmatpush1.msra.mxu0 0.0
        %962 = vmatprep.subr.mxu0 0.0
        %963 = vmatpush1.msra.mxu0 0.0
        %964 = vmatprep.subr.mxu0 0.0
        %965 = vmatpush1.msra.mxu0 0.0
        %966 = vmatprep.subr.mxu0 0.0
        %967 = vmatpush1.msra.mxu0 0.0
        %968 = vmatprep.subr.mxu0 0.0
        %969 = vmatpush1.msra.mxu0 0.0
        %970 = vmatprep.subr.mxu0 0.0
        %971 = vmatpush1.msra.mxu0 0.0
        %972 = vmatprep.subr.mxu0 0.0
        %973 = vmatpush1.msra.mxu0 0.0
        %974 = vmatprep.subr.mxu0 0.0
        %975 = vmatpush1.msra.mxu0 0.0
        %976 = vmatprep.subr.mxu0 0.0
        %977 = vmatpush1.msra.mxu0 0.0
        %978 = vmatprep.subr.mxu0 0.0
        %979 = vmatpush1.msra.mxu0 0.0
        %980 = vmatprep.subr.mxu0 0.0
        %981 = vmatpush1.msra.mxu0 0.0
        %982 = vmatprep.mubr.f32.mxu0 0.0
        %983 = vmatmul.mubr.f32.gmra.mrb[0].mxu0 %v916
        %v984 = vpop.f32.mrb[0].mxu0
        %v985 = vadd.f32 %v913, %v984
        %v986 = vpop.f32.mrb[0].mxu0
        %987 = vdwg.mxu0
        %988 = vst.msk [vmem:[%s367] sm:$0xff] %vm468, %v985
        %s989 = sand.u32 %s187, 1
        %s990 = scalar_lea.sflag [#allocation6], %s989
        %s991 = sand.u32 %s187, 1
        %s992 = smul.addr %s991, 8
        %s993 = scalar_lea.vmem [#allocation13], %s992
        // Predicated region
        $region69: #{tpu_custom_call.1} parent=43 // pred_check
          %p994 = pneg %p197
        $region70: #{tpu_custom_call.1} parent=43 // pred_check_branch
          %996 = sbr.rel (%p994) target = $region72
        $region71: #{tpu_custom_call.1} parent=43 // pred_region
          %s998 = ssub.s32 128, 128
          %999 = vsyncadd %s990, %s998
          %s1000 = smul.addr %s31, 3
          %s1001 = sadd.s32 %s32, %s1000
          %s1002 = smul.addr %s1001, 128
          %s1003 = scalar_lea.hbm %s6, %s1002
          %s1005 = sshll.u32 %s993, 4
          %s1006 = int_to_ptr.vmem [resolvable:$true] %s1005
          %1008 = dma.vmem_to_hbm [thread:$0]  %s1006, 128, %s1003, %s990
        $region72: #{tpu_custom_call.1} parent=43 // pred_fallthru
          _
      $region44: #{tpu_custom_call.1} parent=5 // pred_fallthru
        _
      %p1009 = scmp.le.s32.totalorder 2, %s22
      // Predicated region
      $region73: #{tpu_custom_call.1} parent=5 // pred_check
        %p1010 = pneg %p1009
      $region74: #{tpu_custom_call.1} parent=5 // pred_check_branch
        %1012 = sbr.rel (%p1010) target = $region76
      $region75: #{tpu_custom_call.1} parent=5 // pred_region
        %s1013 = ssub.s32 %s22, 2
        // Predicated region
        $region77: #{tpu_custom_call.1} parent=75 // pred_check
          %p1014 = pneg %p203
        $region78: #{tpu_custom_call.1} parent=75 // pred_check_branch
          %1016 = sbr.rel (%p1014) target = $region80
        $region79: #{tpu_custom_call.1} parent=75 // pred_region
          %s1017 = sand.u32 %s188, 1
          %s1018 = scalar_lea.sflag [#allocation6], %s1017
          %s1019 = sand.u32 %s188, 1
          %s1020 = smul.addr %s1019, 8
          %s1021 = scalar_lea.vmem [#allocation13], %s1020
          %1022 = dma.done %s1018, 128
        $region80: #{tpu_custom_call.1} parent=75 // pred_fallthru
          _
      $region76: #{tpu_custom_call.1} parent=5 // pred_fallthru
        _
    $region6: #{tpu_custom_call.1} parent=1 // loop_footer
      %s26 = sadd.s32 1, %s22
    $region7: #{tpu_custom_call.1} parent=1 // loop_footer_branch
      %21 = sbr.rel target = $region3
    $region8: #{tpu_custom_call.1} parent=1 // loop_exit
      _
    %1023 = vsyncpa [#allocation5], 1
    %s1024 = scalar_lea.sflag [#allocation5], 1
    %1025 = vsyncpa %s1024, 1
    %1026 = vsyncpa [#allocation8], 1
    %s1027 = scalar_lea.sflag [#allocation8], 1
    %1028 = vsyncpa %s1027, 1
    %1029 = vsyncpa [#allocation11], 1
    %1030 = vsyncpa [#allocation6], 1
    %s1031 = scalar_lea.sflag [#allocation6], 1
    %1032 = vsyncpa %s1031, 1

</llo_original>
